<compile_context>
chip_gen: v6e
topology: v6e:2x2x1
jax: 0.10.0
libtpu: 0.0.40
codegen_flags: <defaults>
</compile_context>

<pallas_src>
import jax
import jax.numpy as jnp
from jax.experimental import pallas as pl
from jax.experimental.pallas import tpu as pltpu


def _round_up(x, m):
    return (x + m - 1) // m * m


# ----------------------------------------------------------------------------
# Pallas kernel: the whole Head, fused, for one (row-tile, K-tile) grid point
# ----------------------------------------------------------------------------

def _head_kernel(x_ref, w1_ref, b1_ref, w2_ref, b2_ref, o_ref, acc_ref):
    """acc += x_tile @ w1_tile ; at last K step: o = relu(acc+b1) @ w2 + b2.

    x arrives as f32 and is cast to bf16 in-kernel (free VPU work under the
    MXU); w1/w2 are bf16; accumulation and the epilogue stay f32.
    BN1/BN2 affines are already folded into (w1, b1) / (w2, b2).
    """
    k = pl.program_id(1)

    @pl.when(k == 0)
    def _():
        acc_ref[...] = jnp.zeros_like(acc_ref)

    acc_ref[...] += jnp.dot(
        x_ref[...].astype(jnp.bfloat16), w1_ref[...],
        preferred_element_type=jnp.float32)

    @pl.when(k == pl.num_programs(1) - 1)
    def _():
        h = jnp.maximum(acc_ref[...] + b1_ref[...], 0.0)        # Linear1 + ReLU
        out = jnp.dot(h.astype(jnp.bfloat16), w2_ref[...],
                      preferred_element_type=jnp.float32)        # Linear2
        o_ref[...] = out + b2_ref[...]


def _pick_tk(in_f):
    """K tile: whole in_f when small; otherwise a 128-multiple divisor."""
    if in_f <= 4096:
        return in_f
    for tk in (4096, 2048, 1024, 512, 256, 128):
        if in_f % tk == 0:
            return tk
    return in_f            # awkward in_f: fall back to a single K block


def _pick_tm(B):
    """Row tile: 256 for big batches, >=2 grid steps for moderate ones."""
    if B >= 512:
        return 256
    if B >= 32:
        return min(256, _round_up((B + 1) // 2, 8))
    return _round_up(B, 8)


def head_forward(x, params, *, tm=None, tk=None):
    """x: (B, ...) -> (B, out_f) float32. Flatten happens here."""
    B = x.shape[0]
    xf = x.reshape(B, -1).astype(jnp.float32)

    w1, b1 = params["w1"], params["b1"]        # (in_f, 512) bf16, (1, 512) f32
    w2, b2 = params["w2"], params["b2"]        # (512, out_p) bf16, (1, out_p) f32
    out_f = params["out_f"]
    in_f, hid = w1.shape
    out_p = w2.shape[1]
    assert xf.shape[1] == in_f, (xf.shape, in_f)

    if tm is None:
        tm = _pick_tm(B)
    if tk is None:
        tk = _pick_tk(in_f)
    assert in_f % tk == 0, (in_f, tk)

    Mp = _round_up(B, tm)
    if Mp != B:                                # pad rows only when needed
        xf = jnp.pad(xf, ((0, Mp - B), (0, 0)))

    # VMEM budget for this tiling (double-buffered pipeline tiles + scratch),
    # with headroom; clamped to the smallest physical VMEM (v7x 64 MiB).
    vmem_bytes = (
        2 * tm * tk * 4            # x f32 tiles
        + 2 * tk * hid * 2         # w1 bf16 tiles
        + 2 * hid * out_p * 2      # w2
        + 2 * (hid + out_p) * 4    # biases
        + 2 * tm * out_p * 4       # output tiles
        + tm * hid * 4             # f32 accumulator scratch
        + 2 * tm * hid * 4         # h / epilogue temporaries headroom
    )
    vmem_limit = min(max(vmem_bytes + (4 << 20), 16 << 20), 64 << 20)

    out = pl.pallas_call(
        _head_kernel,
        grid=(Mp // tm, in_f // tk),
        in_specs=[
            pl.BlockSpec((tm, tk), lambda i, k: (i, k)),        # x (f32)
            pl.BlockSpec((tk, hid), lambda i, k: (k, 0)),       # w1 (bf16)
            pl.BlockSpec((1, hid), lambda i, k: (0, 0)),        # b1
            pl.BlockSpec((hid, out_p), lambda i, k: (0, 0)),    # w2 (bf16)
            pl.BlockSpec((1, out_p), lambda i, k: (0, 0)),      # b2
        ],
        out_specs=pl.BlockSpec((tm, out_p), lambda i, k: (i, 0)),
        out_shape=jax.ShapeDtypeStruct((Mp, out_p), jnp.float32),
        scratch_shapes=[pltpu.VMEM((tm, hid), jnp.float32)],
        compiler_params=pltpu.CompilerParams(
            dimension_semantics=("parallel", "arbitrary"),
            vmem_limit_bytes=int(vmem_limit)),
    )(xf, w1, b1, w2, b2)

    return out[:B, :out_f]


# ----------------------------------------------------------------------------
# Parameter prep: fold BN1/BN2 (inference) into the two Linears, pad lanes
# ----------------------------------------------------------------------------

def fold_head_params(raw, eps=1e-5):
    s1 = raw["bn1_gamma"] / jnp.sqrt(raw["bn1_var"] + eps)
    t1 = raw["bn1_beta"] - raw["bn1_mean"] * s1
    s2 = raw["bn2_gamma"] / jnp.sqrt(raw["bn2_var"] + eps)
    t2 = raw["bn2_beta"] - raw["bn2_mean"] * s2

    w1t = raw["l_w"].T                         # (in_f, 512)
    w2t = raw["o_w"].T                         # (512, out_f)
    w1_f = s1[:, None] * w1t                   # BN1 scale folded into W1
    b1_f = raw["l_b"] + t1 @ w1t               # BN1 shift folded into bias
    w2_f = s2[:, None] * w2t                   # BN2 scale folded into W2
    b2_f = raw["o_b"] + t2 @ w2t

    out_f = w2_f.shape[1]
    out_p = max(_round_up(out_f, 128), 128)    # lane-dense output stores
    w2_f = jnp.pad(w2_f, ((0, 0), (0, out_p - out_f)))
    b2_f = jnp.pad(b2_f, (0, out_p - out_f))

    return {
        "w1": w1_f.astype(jnp.bfloat16),
        "b1": b1_f.reshape(1, -1).astype(jnp.float32),
        "w2": w2_f.astype(jnp.bfloat16),
        "b2": b2_f.reshape(1, -1).astype(jnp.float32),
        "out_f": out_f,
    }


def init_raw_params(key, in_f, out_f, hid=512):
    ks = jax.random.split(key, 12)
    return {
        "bn1_gamma": 1.0 + 0.1 * jax.random.normal(ks[0], (in_f,), jnp.float32),
        "bn1_beta": 0.1 * jax.random.normal(ks[1], (in_f,), jnp.float32),
        "bn1_mean": 0.05 * jax.random.normal(ks[2], (in_f,), jnp.float32),
        "bn1_var": jnp.abs(1.0 + 0.1 * jax.random.normal(ks[3], (in_f,),
                                                         jnp.float32)),
        "l_w": jax.random.normal(ks[4], (hid, in_f), jnp.float32)
               / jnp.sqrt(float(in_f)),
        "l_b": 0.1 * jax.random.normal(ks[5], (hid,), jnp.float32),
        "bn2_gamma": 1.0 + 0.1 * jax.random.normal(ks[6], (hid,), jnp.float32),
        "bn2_beta": 0.1 * jax.random.normal(ks[7], (hid,), jnp.float32),
        "bn2_mean": 0.05 * jax.random.normal(ks[8], (hid,), jnp.float32),
        "bn2_var": jnp.abs(1.0 + 0.1 * jax.random.normal(ks[9], (hid,),
                                                         jnp.float32)),
        "o_w": jax.random.normal(ks[10], (out_f, hid), jnp.float32)
               / jnp.sqrt(float(hid)),
        "o_b": 0.1 * jax.random.normal(ks[11], (out_f,), jnp.float32),
    }


def head_reference(x, raw, eps=1e-5):
    """Pure-JAX f32 reference matching the PyTorch forward (eval mode)."""
    B = x.shape[0]
    h = x.reshape(B, -1)
    s1 = raw["bn1_gamma"] / jnp.sqrt(raw["bn1_var"] + eps)
    h = (h - raw["bn1_mean"]) * s1 + raw["bn1_beta"]          # b1
    h = h @ raw["l_w"].T + raw["l_b"]                         # l
    h = jnp.maximum(h, 0.0)                                   # r
    s2 = raw["bn2_gamma"] / jnp.sqrt(raw["bn2_var"] + eps)
    h = (h - raw["bn2_mean"]) * s2 + raw["bn2_beta"]          # b2
    return h @ raw["o_w"].T + raw["o_b"]                      # o


if __name__ == "__main__":
    key = jax.random.PRNGKey(0)
    kx, kp = jax.random.split(key)

    B, C, H, W = 2, 4, 16, 16            # Flatten -> in_f = 1024
    out_f = 1
    x = jax.random.normal(kx, (B, C, H, W), jnp.float32)

    raw = init_raw_params(kp, in_f=C * H * W, out_f=out_f)
    params = fold_head_params(raw)

    out = head_forward(x, params)
    out = jax.block_until_ready(out)
    assert out.shape == (B, out_f), out.shape
    assert bool(jnp.all(jnp.isfinite(out)))

    # Validate against the f32 reference (tolerance reflects bf16 matmuls
    # with f32 accumulation; tightened vs. the previous 10% check).
    ref = head_reference(x, raw)
    err = float(jnp.max(jnp.abs(out - ref)))
    scale = float(jnp.max(jnp.abs(ref))) + 1e-6
    assert err <= 2.5e-2 * scale + 2.5e-2, (err, scale)

    print("KERNEL_OK")
</pallas_src>

<mosaic_0001>
module attributes {stable_mosaic.version = 11 : i64} {
  func.func @_head_kernel(%arg0: i32, %arg1: i32, %arg2: memref<8x1024xf32, #tpu.memory_space<vmem>>, %arg3: memref<1024x512xbf16, #tpu.memory_space<vmem>>, %arg4: memref<1x512xf32, #tpu.memory_space<vmem>>, %arg5: memref<512x128xbf16, #tpu.memory_space<vmem>>, %arg6: memref<1x128xf32, #tpu.memory_space<vmem>>, %arg7: memref<8x128xf32, #tpu.memory_space<vmem>>, %arg8: memref<8x512xf32, #tpu.memory_space<vmem>>) attributes {dimension_semantics = [#tpu.dimension_semantics<parallel>, #tpu.dimension_semantics<arbitrary>], iteration_bounds = array<i64: 1, 1>, scalar_prefetch = 0 : i64, scratch_operands = 1 : i64, tpu.core_type = #tpu.core_type<tc>, window_params = [{transform_indices = @transform_0, window_bounds = array<i64: 8, 1024>}, {transform_indices = @transform_1, window_bounds = array<i64: 1024, 512>}, {pipeline_mode = #tpu.pipeline_mode<synchronous>, transform_indices = @transform_2, window_bounds = array<i64: 1, 512>}, {pipeline_mode = #tpu.pipeline_mode<synchronous>, transform_indices = @transform_3, window_bounds = array<i64: 512, 128>}, {pipeline_mode = #tpu.pipeline_mode<synchronous>, transform_indices = @transform_4, window_bounds = array<i64: 1, 128>}, {transform_indices = @transform_5, window_bounds = array<i64: 8, 128>}]} {
    %c0_i32 = arith.constant 0 : i32
    %0 = arith.cmpi eq, %arg1, %c0_i32 : i32
    %1 = arith.extui %0 : i1 to i32
    %c0_i32_0 = arith.constant 0 : i32
    %2 = arith.cmpi ne, %1, %c0_i32_0 : i32
    scf.if %2 {
      %cst_10 = arith.constant 0.000000e+00 : f32
      %13 = vector.broadcast %cst_10 : f32 to vector<8x512xf32>
      %c0_11 = arith.constant 0 : index
      %c0_12 = arith.constant 0 : index
      %14 = vector.load %arg8[%c0_11, %c0_12] : memref<8x512xf32, #tpu.memory_space<vmem>>, vector<8x512xf32>
      tpu.vector_store %arg8[%c0_11, %c0_12], %13 {strides = array<i32>} : memref<8x512xf32, #tpu.memory_space<vmem>>, vector<8x512xf32>,
    } else {
    }
    %c0 = arith.constant 0 : index
    %c0_1 = arith.constant 0 : index
    %3 = vector.load %arg8[%c0, %c0_1] : memref<8x512xf32, #tpu.memory_space<vmem>>, vector<8x512xf32>
    %c0_2 = arith.constant 0 : index
    %c0_3 = arith.constant 0 : index
    %4 = vector.load %arg2[%c0_2, %c0_3] : memref<8x1024xf32, #tpu.memory_space<vmem>>, vector<8x1024xf32>
    %5 = arith.truncf %4 : vector<8x1024xf32> to vector<8x1024xbf16>
    %c0_4 = arith.constant 0 : index
    %c0_5 = arith.constant 0 : index
    %6 = vector.load %arg3[%c0_4, %c0_5] : memref<1024x512xbf16, #tpu.memory_space<vmem>>, vector<1024x512xbf16>
    %cst = arith.constant dense<0.000000e+00> : vector<8x512xf32>
    %7 = tpu.matmul %5, %6, %cst {dimension_numbers = #tpu.dot_dimension_numbers<[1], [0], [0], [1], [0, 0, 1, 1], [], []>} : vector<8x1024xbf16>, vector<1024x512xbf16>, vector<8x512xf32> -> vector<8x512xf32>
    %8 = arith.addf %3, %7 : vector<8x512xf32>
    %c0_6 = arith.constant 0 : index
    %c0_7 = arith.constant 0 : index
    %9 = vector.load %arg8[%c0_6, %c0_7] : memref<8x512xf32, #tpu.memory_space<vmem>>, vector<8x512xf32>
    tpu.vector_store %arg8[%c0_6, %c0_7], %8 {strides = array<i32>} : memref<8x512xf32, #tpu.memory_space<vmem>>, vector<8x512xf32>,
    %c0_i32_8 = arith.constant 0 : i32
    %10 = arith.cmpi eq, %arg1, %c0_i32_8 : i32
    %11 = arith.extui %10 : i1 to i32
    %c0_i32_9 = arith.constant 0 : i32
    %12 = arith.cmpi ne, %11, %c0_i32_9 : i32
    scf.if %12 {
      %c0_10 = arith.constant 0 : index
      %c0_11 = arith.constant 0 : index
      %13 = vector.load %arg8[%c0_10, %c0_11] : memref<8x512xf32, #tpu.memory_space<vmem>>, vector<8x512xf32>
      %c0_12 = arith.constant 0 : index
      %c0_13 = arith.constant 0 : index
      %14 = vector.load %arg4[%c0_12, %c0_13] : memref<1x512xf32, #tpu.memory_space<vmem>>, vector<1x512xf32>
      %15 = vector.broadcast %14 : vector<1x512xf32> to vector<8x512xf32>
      %16 = arith.addf %13, %15 : vector<8x512xf32>
      %cst_14 = arith.constant 0.000000e+00 : f32
      %17 = vector.broadcast %cst_14 : f32 to vector<8x512xf32>
      %18 = arith.maximumf %16, %17 : vector<8x512xf32>
      %19 = arith.truncf %18 : vector<8x512xf32> to vector<8x512xbf16>
      %c0_15 = arith.constant 0 : index
      %c0_16 = arith.constant 0 : index
      %20 = vector.load %arg5[%c0_15, %c0_16] : memref<512x128xbf16, #tpu.memory_space<vmem>>, vector<512x128xbf16>
      %cst_17 = arith.constant dense<0.000000e+00> : vector<8x128xf32>
      %21 = tpu.matmul %19, %20, %cst_17 {dimension_numbers = #tpu.dot_dimension_numbers<[1], [0], [0], [1], [0, 0, 1, 1], [], []>} : vector<8x512xbf16>, vector<512x128xbf16>, vector<8x128xf32> -> vector<8x128xf32>
      %c0_18 = arith.constant 0 : index
      %c0_19 = arith.constant 0 : index
      %22 = vector.load %arg6[%c0_18, %c0_19] : memref<1x128xf32, #tpu.memory_space<vmem>>, vector<1x128xf32>
      %23 = vector.broadcast %22 : vector<1x128xf32> to vector<8x128xf32>
      %24 = arith.addf %21, %23 : vector<8x128xf32>
      %c0_20 = arith.constant 0 : index
      %c0_21 = arith.constant 0 : index
      %25 = vector.load %arg7[%c0_20, %c0_21] : memref<8x128xf32, #tpu.memory_space<vmem>>, vector<8x128xf32>
      tpu.vector_store %arg7[%c0_20, %c0_21], %24 {strides = array<i32>} : memref<8x128xf32, #tpu.memory_space<vmem>>, vector<8x128xf32>,
    } else {
    }
    return
  }
  func.func @transform_0(%arg0: i32, %arg1: i32) -> (i32, i32) {
    %c0_i32 = arith.constant 0 : i32
    return %arg0, %arg1 : i32, i32
  }
  func.func @transform_1(%arg0: i32, %arg1: i32) -> (i32, i32) {
    %c0_i32 = arith.constant 0 : i32
    %c0_i32_0 = arith.constant 0 : i32
    return %arg1, %c0_i32 : i32, i32
  }
  func.func @transform_2(%arg0: i32, %arg1: i32) -> (i32, i32) {
    %c0_i32 = arith.constant 0 : i32
    %c0_i32_0 = arith.constant 0 : i32
    %c0_i32_1 = arith.constant 0 : i32
    return %c0_i32, %c0_i32_0 : i32, i32
  }
  func.func @transform_3(%arg0: i32, %arg1: i32) -> (i32, i32) {
    %c0_i32 = arith.constant 0 : i32
    %c0_i32_0 = arith.constant 0 : i32
    %c0_i32_1 = arith.constant 0 : i32
    return %c0_i32, %c0_i32_0 : i32, i32
  }
  func.func @transform_4(%arg0: i32, %arg1: i32) -> (i32, i32) {
    %c0_i32 = arith.constant 0 : i32
    %c0_i32_0 = arith.constant 0 : i32
    %c0_i32_1 = arith.constant 0 : i32
    return %c0_i32, %c0_i32_0 : i32, i32
  }
  func.func @transform_5(%arg0: i32, %arg1: i32) -> (i32, i32) {
    %c0_i32 = arith.constant 0 : i32
    %c0_i32_0 = arith.constant 0 : i32
    return %arg0, %c0_i32 : i32, i32
  }
}

</mosaic_0001>

<llo_original>
// kernel: tpu_custom_call.1
$region0: #{tpu_custom_call.1}
  #allocation0 [shape = 'u32[]', space=smem, size = 0x4, offset = 0x4, fixed_abs, tag = 'smem constant byte address 0x4 - core index']
  #allocation1 [shape = 'u32[144,128]{1,0:T(1,128)}', space=vmem, size = 0x12000, scoped, tag = 'internal scratch']
  #allocation2 [shape = 'f32[8,512]{1,0:T(8,128)}', space=vmem, size = 0x4000, scoped, tag = 'scratch operand']
  %s0 = inlined_call_operand.hbm [shape: f32[8,1024], index: 0, kind: input, shape index: {}]
  %s1 = inlined_call_operand.hbm [shape: bf16[1024,512], index: 1, kind: input, shape index: {}]
  %s2 = inlined_call_operand.hbm [shape: f32[1,512], index: 2, kind: input, shape index: {}]
  %s3 = inlined_call_operand.hbm [shape: bf16[512,128], index: 3, kind: input, shape index: {}]
  %s4 = inlined_call_operand.vmem [shape: f32[1,128], index: 4, kind: input, shape index: {}]
  %s5 = inlined_call_operand.hbm [shape: f32[8,128], index: 5, kind: output, shape index: {}]
  %s6 = sld [smem:[#allocation0]]
  $region54: #{tpu_custom_call.1} parent=0
    _
  %s8 = ssub.s32 1, %s6
  %s9 = scalar_select 0, %s8, %s6
  $region1: #{tpu_custom_call.1} parent=0
    #allocation3 [shape = 'u8[32768]{0}', space=vmem, size = 0x8000, scoped, tag = 'input window, operand 0, single buffered']
    #allocation4 [shape = 's32[1]{0}', space=sflag, size = 0x4, scoped, tag = 'scoped memory for tpu_custom_call.1']
    #allocation5 [shape = 's32[1]{0}', space=sflag, size = 0x4, scoped, tag = 'scoped memory for tpu_custom_call.1']
    #allocation6 [shape = 'u8[1048576]{0}', space=vmem, size = 0x100000, scoped, tag = 'input window, operand 1, single buffered']
    #allocation7 [shape = 's32[1]{0}', space=sflag, size = 0x4, scoped, tag = 'scoped memory for tpu_custom_call.1']
    #allocation8 [shape = 'u8[2048]{0}', space=vmem, size = 0x800, scoped, tag = 'input window, operand 2, single buffered']
    #allocation9 [shape = 'u8[131072]{0}', space=vmem, size = 0x20000, scoped, tag = 'input window, operand 3, single buffered']
    #allocation10 [shape = 's32[1]{0}', space=sflag, size = 0x4, scoped, tag = 'scoped memory for tpu_custom_call.1']
    #allocation11 [shape = 'u8[4096]{0}', space=vmem, size = 0x1000, scoped, tag = 'output window, operand 0, single buffered']
    %10 = vsyncpa [#allocation4], 0
    %11 = vsyncpa [#allocation7], 0
    %12 = vsyncpa [#allocation10], 0
    %13 = vsyncpa [#allocation5], 0
    // Predicated region
    $region2: #{tpu_custom_call.1} parent=1 // pred_check
      _
    $region3: #{tpu_custom_call.1} parent=1 // pred_check_branch
      %15 = sbr.rel (0) target = $region5
    $region4: #{tpu_custom_call.1} parent=1 // pred_region
      %s17 = ssub.s32 1024, 1024
      %18 = vsyncadd [#allocation4], %s17
      %s20 = sshll.u32 [#allocation3], 4
      %s21 = int_to_ptr.vmem [resolvable:$true] %s20
      %23 = dma.hbm_to_vmem [thread:$0]  %s0, 1024, %s21, [#allocation4]
    $region5: #{tpu_custom_call.1} parent=1 // pred_fallthru
      _
    // Predicated region
    $region6: #{tpu_custom_call.1} parent=1 // pred_check
      _
    $region7: #{tpu_custom_call.1} parent=1 // pred_check_branch
      %25 = sbr.rel (0) target = $region9
    $region8: #{tpu_custom_call.1} parent=1 // pred_region
      %s27 = ssub.s32 32768, 32768
      %28 = vsyncadd [#allocation7], %s27
      %s29 = sshll.u32 [#allocation6], 4
      %s30 = int_to_ptr.vmem [resolvable:$true] %s29
      %35 = dma.hbm_to_vmem [thread:$0]  %s1, 32768, %s30, [#allocation7], 256, 256, 16
    $region9: #{tpu_custom_call.1} parent=1 // pred_fallthru
      _
    // Predicated region
    $region10: #{tpu_custom_call.1} parent=1 // pred_check
      _
    $region11: #{tpu_custom_call.1} parent=1 // pred_check_branch
      %37 = sbr.rel (0) target = $region13
    $region12: #{tpu_custom_call.1} parent=1 // pred_region
      %s39 = ssub.s32 64, 64
      %40 = vsyncadd [#allocation7], %s39
      %s42 = sshll.u32 [#allocation8], 4
      %s43 = int_to_ptr.vmem [resolvable:$true] %s42
      %45 = dma.hbm_to_vmem [thread:$0]  %s2, 64, %s43, [#allocation7]
    $region13: #{tpu_custom_call.1} parent=1 // pred_fallthru
      _
    // Predicated region
    $region14: #{tpu_custom_call.1} parent=1 // pred_check
      _
    $region15: #{tpu_custom_call.1} parent=1 // pred_check_branch
      %47 = sbr.rel (0) target = $region17
    $region16: #{tpu_custom_call.1} parent=1 // pred_region
      %s49 = ssub.s32 4096, 4096
      %50 = vsyncadd [#allocation10], %s49
      %s51 = sshll.u32 [#allocation9], 4
      %s52 = int_to_ptr.vmem [resolvable:$true] %s51
      %57 = dma.hbm_to_vmem [thread:$0]  %s3, 4096, %s52, [#allocation10], 64, 64, 4
    $region17: #{tpu_custom_call.1} parent=1 // pred_fallthru
      _
    // Predicated region
    $region18: #{tpu_custom_call.1} parent=1 // pred_check
      _
    $region19: #{tpu_custom_call.1} parent=1 // pred_check_branch
      %59 = sbr.rel (0) target = $region21
    $region20: #{tpu_custom_call.1} parent=1 // pred_region
      _
    $region21: #{tpu_custom_call.1} parent=1 // pred_fallthru
      _
    // Predicated region
    $region22: #{tpu_custom_call.1} parent=1 // pred_check
      _
    $region23: #{tpu_custom_call.1} parent=1 // pred_check_branch
      %61 = sbr.rel (0) target = $region25
    $region24: #{tpu_custom_call.1} parent=1 // pred_region
      %62 = dma.done [#allocation4], 1024
    $region25: #{tpu_custom_call.1} parent=1 // pred_fallthru
      _
    // Predicated region
    $region26: #{tpu_custom_call.1} parent=1 // pred_check
      _
    $region27: #{tpu_custom_call.1} parent=1 // pred_check_branch
      %64 = sbr.rel (0) target = $region29
    $region28: #{tpu_custom_call.1} parent=1 // pred_region
      %65 = dma.done [#allocation7], 32768
    $region29: #{tpu_custom_call.1} parent=1 // pred_fallthru
      _
    // Predicated region
    $region30: #{tpu_custom_call.1} parent=1 // pred_check
      _
    $region31: #{tpu_custom_call.1} parent=1 // pred_check_branch
      %67 = sbr.rel (0) target = $region33
    $region32: #{tpu_custom_call.1} parent=1 // pred_region
      %68 = dma.done [#allocation7], 64
    $region33: #{tpu_custom_call.1} parent=1 // pred_fallthru
      _
    // Predicated region
    $region34: #{tpu_custom_call.1} parent=1 // pred_check
      _
    $region35: #{tpu_custom_call.1} parent=1 // pred_check_branch
      %70 = sbr.rel (0) target = $region37
    $region36: #{tpu_custom_call.1} parent=1 // pred_region
      %71 = dma.done [#allocation10], 4096
    $region37: #{tpu_custom_call.1} parent=1 // pred_fallthru
      _
    %p73 = scmp.eq.s32.totalorder 0, 0
    // Predicated region
    $region38: #{tpu_custom_call.1} parent=1 // pred_check
      %p74 = pneg %p73
    $region39: #{tpu_custom_call.1} parent=1 // pred_check_branch
      %76 = sbr.rel (%p74) target = $region41
    $region40: #{tpu_custom_call.1} parent=1 // pred_region
      %77 = vst [vmem:[#allocation2] sm:$0xff] 0.0
      %78 = vst [vmem:[#allocation2 + $0x8] sm:$0xff] 0.0
      %79 = vst [vmem:[#allocation2 + $0x10] sm:$0xff] 0.0
      %80 = vst [vmem:[#allocation2 + $0x18] sm:$0xff] 0.0
    $region41: #{tpu_custom_call.1} parent=1 // pred_fallthru
      _
    %v81 = vld [vmem:[#allocation2] sm:$0xff]
    %v82 = vld [vmem:[#allocation2 + $0x8] sm:$0xff]
    %v83 = vld [vmem:[#allocation2 + $0x10] sm:$0xff]
    %v84 = vld [vmem:[#allocation2 + $0x18] sm:$0xff]
    %v85 = vld [vmem:[#allocation3] sm:$0xff]
    %v86 = vld [vmem:[#allocation3 + $0x8] sm:$0xff]
    %v87 = vld [vmem:[#allocation3 + $0x10] sm:$0xff]
    %v88 = vld [vmem:[#allocation3 + $0x18] sm:$0xff]
    %v89 = vld [vmem:[#allocation3 + $0x20] sm:$0xff]
    %v90 = vld [vmem:[#allocation3 + $0x28] sm:$0xff]
    %v91 = vld [vmem:[#allocation3 + $0x30] sm:$0xff]
    %v92 = vld [vmem:[#allocation3 + $0x38] sm:$0xff]
    %v93 = vpack.c.bf16 %v85, %v85
    %v94 = vpack.c.bf16 %v86, %v86
    %v95 = vpack.c.bf16 %v87, %v87
    %v96 = vpack.c.bf16 %v88, %v88
    %v97 = vpack.c.bf16 %v89, %v89
    %v98 = vpack.c.bf16 %v90, %v90
    %v99 = vpack.c.bf16 %v91, %v91
    %v100 = vpack.c.bf16 %v92, %v92
    %v101 = vld [vmem:[#allocation6] sm:$0xff]
    %v102 = vld [vmem:[#allocation6 + $0x8] sm:$0xff]
    %v103 = vld [vmem:[#allocation6 + $0x10] sm:$0xff]
    %v104 = vld [vmem:[#allocation6 + $0x18] sm:$0xff]
    %v105 = vld [vmem:[#allocation6 + $0x20] sm:$0xff]
    %v106 = vld [vmem:[#allocation6 + $0x28] sm:$0xff]
    %v107 = vld [vmem:[#allocation6 + $0x30] sm:$0xff]
    %v108 = vld [vmem:[#allocation6 + $0x38] sm:$0xff]
    %v109 = vld [vmem:[#allocation6 + $0x40] sm:$0xff]
    %v110 = vld [vmem:[#allocation6 + $0x48] sm:$0xff]
    %v111 = vld [vmem:[#allocation6 + $0x50] sm:$0xff]
    %v112 = vld [vmem:[#allocation6 + $0x58] sm:$0xff]
    %v113 = vld [vmem:[#allocation6 + $0x60] sm:$0xff]
    %v114 = vld [vmem:[#allocation6 + $0x68] sm:$0xff]
    %v115 = vld [vmem:[#allocation6 + $0x70] sm:$0xff]
    %v116 = vld [vmem:[#allocation6 + $0x78] sm:$0xff]
    %v117 = vld [vmem:[#allocation6 + $0x80] sm:$0xff]
    %v118 = vld [vmem:[#allocation6 + $0x88] sm:$0xff]
    %v119 = vld [vmem:[#allocation6 + $0x90] sm:$0xff]
    %v120 = vld [vmem:[#allocation6 + $0x98] sm:$0xff]
    %v121 = vld [vmem:[#allocation6 + $0xa0] sm:$0xff]
    %v122 = vld [vmem:[#allocation6 + $0xa8] sm:$0xff]
    %v123 = vld [vmem:[#allocation6 + $0xb0] sm:$0xff]
    %v124 = vld [vmem:[#allocation6 + $0xb8] sm:$0xff]
    %v125 = vld [vmem:[#allocation6 + $0xc0] sm:$0xff]
    %v126 = vld [vmem:[#allocation6 + $0xc8] sm:$0xff]
    %v127 = vld [vmem:[#allocation6 + $0xd0] sm:$0xff]
    %v128 = vld [vmem:[#allocation6 + $0xd8] sm:$0xff]
    %v129 = vld [vmem:[#allocation6 + $0xe0] sm:$0xff]
    %v130 = vld [vmem:[#allocation6 + $0xe8] sm:$0xff]
    %v131 = vld [vmem:[#allocation6 + $0xf0] sm:$0xff]
    %v132 = vld [vmem:[#allocation6 + $0xf8] sm:$0xff]
    %v133 = vld [vmem:[#allocation6 + $0x100] sm:$0xff]
    %v134 = vld [vmem:[#allocation6 + $0x108] sm:$0xff]
    %v135 = vld [vmem:[#allocation6 + $0x110] sm:$0xff]
    %v136 = vld [vmem:[#allocation6 + $0x118] sm:$0xff]
    %v137 = vld [vmem:[#allocation6 + $0x120] sm:$0xff]
    %v138 = vld [vmem:[#allocation6 + $0x128] sm:$0xff]
    %v139 = vld [vmem:[#allocation6 + $0x130] sm:$0xff]
    %v140 = vld [vmem:[#allocation6 + $0x138] sm:$0xff]
    %v141 = vld [vmem:[#allocation6 + $0x140] sm:$0xff]
    %v142 = vld [vmem:[#allocation6 + $0x148] sm:$0xff]
    %v143 = vld [vmem:[#allocation6 + $0x150] sm:$0xff]
    %v144 = vld [vmem:[#allocation6 + $0x158] sm:$0xff]
    %v145 = vld [vmem:[#allocation6 + $0x160] sm:$0xff]
    %v146 = vld [vmem:[#allocation6 + $0x168] sm:$0xff]
    %v147 = vld [vmem:[#allocation6 + $0x170] sm:$0xff]
    %v148 = vld [vmem:[#allocation6 + $0x178] sm:$0xff]
    %v149 = vld [vmem:[#allocation6 + $0x180] sm:$0xff]
    %v150 = vld [vmem:[#allocation6 + $0x188] sm:$0xff]
    %v151 = vld [vmem:[#allocation6 + $0x190] sm:$0xff]
    %v152 = vld [vmem:[#allocation6 + $0x198] sm:$0xff]
    %v153 = vld [vmem:[#allocation6 + $0x1a0] sm:$0xff]
    %v154 = vld [vmem:[#allocation6 + $0x1a8] sm:$0xff]
    %v155 = vld [vmem:[#allocation6 + $0x1b0] sm:$0xff]
    %v156 = vld [vmem:[#allocation6 + $0x1b8] sm:$0xff]
    %v157 = vld [vmem:[#allocation6 + $0x1c0] sm:$0xff]
    %v158 = vld [vmem:[#allocation6 + $0x1c8] sm:$0xff]
    %v159 = vld [vmem:[#allocation6 + $0x1d0] sm:$0xff]
    %v160 = vld [vmem:[#allocation6 + $0x1d8] sm:$0xff]
    %v161 = vld [vmem:[#allocation6 + $0x1e0] sm:$0xff]
    %v162 = vld [vmem:[#allocation6 + $0x1e8] sm:$0xff]
    %v163 = vld [vmem:[#allocation6 + $0x1f0] sm:$0xff]
    %v164 = vld [vmem:[#allocation6 + $0x1f8] sm:$0xff]
    %v165 = vld [vmem:[#allocation6 + $0x200] sm:$0xff]
    %v166 = vld [vmem:[#allocation6 + $0x208] sm:$0xff]
    %v167 = vld [vmem:[#allocation6 + $0x210] sm:$0xff]
    %v168 = vld [vmem:[#allocation6 + $0x218] sm:$0xff]
    %v169 = vld [vmem:[#allocation6 + $0x220] sm:$0xff]
    %v170 = vld [vmem:[#allocation6 + $0x228] sm:$0xff]
    %v171 = vld [vmem:[#allocation6 + $0x230] sm:$0xff]
    %v172 = vld [vmem:[#allocation6 + $0x238] sm:$0xff]
    %v173 = vld [vmem:[#allocation6 + $0x240] sm:$0xff]
    %v174 = vld [vmem:[#allocation6 + $0x248] sm:$0xff]
    %v175 = vld [vmem:[#allocation6 + $0x250] sm:$0xff]
    %v176 = vld [vmem:[#allocation6 + $0x258] sm:$0xff]
    %v177 = vld [vmem:[#allocation6 + $0x260] sm:$0xff]
    %v178 = vld [vmem:[#allocation6 + $0x268] sm:$0xff]
    %v179 = vld [vmem:[#allocation6 + $0x270] sm:$0xff]
    %v180 = vld [vmem:[#allocation6 + $0x278] sm:$0xff]
    %v181 = vld [vmem:[#allocation6 + $0x280] sm:$0xff]
    %v182 = vld [vmem:[#allocation6 + $0x288] sm:$0xff]
    %v183 = vld [vmem:[#allocation6 + $0x290] sm:$0xff]
    %v184 = vld [vmem:[#allocation6 + $0x298] sm:$0xff]
    %v185 = vld [vmem:[#allocation6 + $0x2a0] sm:$0xff]
    %v186 = vld [vmem:[#allocation6 + $0x2a8] sm:$0xff]
    %v187 = vld [vmem:[#allocation6 + $0x2b0] sm:$0xff]
    %v188 = vld [vmem:[#allocation6 + $0x2b8] sm:$0xff]
    %v189 = vld [vmem:[#allocation6 + $0x2c0] sm:$0xff]
    %v190 = vld [vmem:[#allocation6 + $0x2c8] sm:$0xff]
    %v191 = vld [vmem:[#allocation6 + $0x2d0] sm:$0xff]
    %v192 = vld [vmem:[#allocation6 + $0x2d8] sm:$0xff]
    %v193 = vld [vmem:[#allocation6 + $0x2e0] sm:$0xff]
    %v194 = vld [vmem:[#allocation6 + $0x2e8] sm:$0xff]
    %v195 = vld [vmem:[#allocation6 + $0x2f0] sm:$0xff]
    %v196 = vld [vmem:[#allocation6 + $0x2f8] sm:$0xff]
    %v197 = vld [vmem:[#allocation6 + $0x300] sm:$0xff]
    %v198 = vld [vmem:[#allocation6 + $0x308] sm:$0xff]
    %v199 = vld [vmem:[#allocation6 + $0x310] sm:$0xff]
    %v200 = vld [vmem:[#allocation6 + $0x318] sm:$0xff]
    %v201 = vld [vmem:[#allocation6 + $0x320] sm:$0xff]
    %v202 = vld [vmem:[#allocation6 + $0x328] sm:$0xff]
    %v203 = vld [vmem:[#allocation6 + $0x330] sm:$0xff]
    %v204 = vld [vmem:[#allocation6 + $0x338] sm:$0xff]
    %v205 = vld [vmem:[#allocation6 + $0x340] sm:$0xff]
    %v206 = vld [vmem:[#allocation6 + $0x348] sm:$0xff]
    %v207 = vld [vmem:[#allocation6 + $0x350] sm:$0xff]
    %v208 = vld [vmem:[#allocation6 + $0x358] sm:$0xff]
    %v209 = vld [vmem:[#allocation6 + $0x360] sm:$0xff]
    %v210 = vld [vmem:[#allocation6 + $0x368] sm:$0xff]
    %v211 = vld [vmem:[#allocation6 + $0x370] sm:$0xff]
    %v212 = vld [vmem:[#allocation6 + $0x378] sm:$0xff]
    %v213 = vld [vmem:[#allocation6 + $0x380] sm:$0xff]
    %v214 = vld [vmem:[#allocation6 + $0x388] sm:$0xff]
    %v215 = vld [vmem:[#allocation6 + $0x390] sm:$0xff]
    %v216 = vld [vmem:[#allocation6 + $0x398] sm:$0xff]
    %v217 = vld [vmem:[#allocation6 + $0x3a0] sm:$0xff]
    %v218 = vld [vmem:[#allocation6 + $0x3a8] sm:$0xff]
    %v219 = vld [vmem:[#allocation6 + $0x3b0] sm:$0xff]
    %v220 = vld [vmem:[#allocation6 + $0x3b8] sm:$0xff]
    %v221 = vld [vmem:[#allocation6 + $0x3c0] sm:$0xff]
    %v222 = vld [vmem:[#allocation6 + $0x3c8] sm:$0xff]
    %v223 = vld [vmem:[#allocation6 + $0x3d0] sm:$0xff]
    %v224 = vld [vmem:[#allocation6 + $0x3d8] sm:$0xff]
    %v225 = vld [vmem:[#allocation6 + $0x3e0] sm:$0xff]
    %v226 = vld [vmem:[#allocation6 + $0x3e8] sm:$0xff]
    %v227 = vld [vmem:[#allocation6 + $0x3f0] sm:$0xff]
    %v228 = vld [vmem:[#allocation6 + $0x3f8] sm:$0xff]
    %v229 = vld [vmem:[#allocation6 + $0x400] sm:$0xff]
    %v230 = vld [vmem:[#allocation6 + $0x408] sm:$0xff]
    %v231 = vld [vmem:[#allocation6 + $0x410] sm:$0xff]
    %v232 = vld [vmem:[#allocation6 + $0x418] sm:$0xff]
    %v233 = vld [vmem:[#allocation6 + $0x420] sm:$0xff]
    %v234 = vld [vmem:[#allocation6 + $0x428] sm:$0xff]
    %v235 = vld [vmem:[#allocation6 + $0x430] sm:$0xff]
    %v236 = vld [vmem:[#allocation6 + $0x438] sm:$0xff]
    %v237 = vld [vmem:[#allocation6 + $0x440] sm:$0xff]
    %v238 = vld [vmem:[#allocation6 + $0x448] sm:$0xff]
    %v239 = vld [vmem:[#allocation6 + $0x450] sm:$0xff]
    %v240 = vld [vmem:[#allocation6 + $0x458] sm:$0xff]
    %v241 = vld [vmem:[#allocation6 + $0x460] sm:$0xff]
    %v242 = vld [vmem:[#allocation6 + $0x468] sm:$0xff]
    %v243 = vld [vmem:[#allocation6 + $0x470] sm:$0xff]
    %v244 = vld [vmem:[#allocation6 + $0x478] sm:$0xff]
    %v245 = vld [vmem:[#allocation6 + $0x480] sm:$0xff]
    %v246 = vld [vmem:[#allocation6 + $0x488] sm:$0xff]
    %v247 = vld [vmem:[#allocation6 + $0x490] sm:$0xff]
    %v248 = vld [vmem:[#allocation6 + $0x498] sm:$0xff]
    %v249 = vld [vmem:[#allocation6 + $0x4a0] sm:$0xff]
    %v250 = vld [vmem:[#allocation6 + $0x4a8] sm:$0xff]
    %v251 = vld [vmem:[#allocation6 + $0x4b0] sm:$0xff]
    %v252 = vld [vmem:[#allocation6 + $0x4b8] sm:$0xff]
    %v253 = vld [vmem:[#allocation6 + $0x4c0] sm:$0xff]
    %v254 = vld [vmem:[#allocation6 + $0x4c8] sm:$0xff]
    %v255 = vld [vmem:[#allocation6 + $0x4d0] sm:$0xff]
    %v256 = vld [vmem:[#allocation6 + $0x4d8] sm:$0xff]
    %v257 = vld [vmem:[#allocation6 + $0x4e0] sm:$0xff]
    %v258 = vld [vmem:[#allocation6 + $0x4e8] sm:$0xff]
    %v259 = vld [vmem:[#allocation6 + $0x4f0] sm:$0xff]
    %v260 = vld [vmem:[#allocation6 + $0x4f8] sm:$0xff]
    %v261 = vld [vmem:[#allocation6 + $0x500] sm:$0xff]
    %v262 = vld [vmem:[#allocation6 + $0x508] sm:$0xff]
    %v263 = vld [vmem:[#allocation6 + $0x510] sm:$0xff]
    %v264 = vld [vmem:[#allocation6 + $0x518] sm:$0xff]
    %v265 = vld [vmem:[#allocation6 + $0x520] sm:$0xff]
    %v266 = vld [vmem:[#allocation6 + $0x528] sm:$0xff]
    %v267 = vld [vmem:[#allocation6 + $0x530] sm:$0xff]
    %v268 = vld [vmem:[#allocation6 + $0x538] sm:$0xff]
    %v269 = vld [vmem:[#allocation6 + $0x540] sm:$0xff]
    %v270 = vld [vmem:[#allocation6 + $0x548] sm:$0xff]
    %v271 = vld [vmem:[#allocation6 + $0x550] sm:$0xff]
    %v272 = vld [vmem:[#allocation6 + $0x558] sm:$0xff]
    %v273 = vld [vmem:[#allocation6 + $0x560] sm:$0xff]
    %v274 = vld [vmem:[#allocation6 + $0x568] sm:$0xff]
    %v275 = vld [vmem:[#allocation6 + $0x570] sm:$0xff]
    %v276 = vld [vmem:[#allocation6 + $0x578] sm:$0xff]
    %v277 = vld [vmem:[#allocation6 + $0x580] sm:$0xff]
    %v278 = vld [vmem:[#allocation6 + $0x588] sm:$0xff]
    %v279 = vld [vmem:[#allocation6 + $0x590] sm:$0xff]
    %v280 = vld [vmem:[#allocation6 + $0x598] sm:$0xff]
    %v281 = vld [vmem:[#allocation6 + $0x5a0] sm:$0xff]
    %v282 = vld [vmem:[#allocation6 + $0x5a8] sm:$0xff]
    %v283 = vld [vmem:[#allocation6 + $0x5b0] sm:$0xff]
    %v284 = vld [vmem:[#allocation6 + $0x5b8] sm:$0xff]
    %v285 = vld [vmem:[#allocation6 + $0x5c0] sm:$0xff]
    %v286 = vld [vmem:[#allocation6 + $0x5c8] sm:$0xff]
    %v287 = vld [vmem:[#allocation6 + $0x5d0] sm:$0xff]
    %v288 = vld [vmem:[#allocation6 + $0x5d8] sm:$0xff]
    %v289 = vld [vmem:[#allocation6 + $0x5e0] sm:$0xff]
    %v290 = vld [vmem:[#allocation6 + $0x5e8] sm:$0xff]
    %v291 = vld [vmem:[#allocation6 + $0x5f0] sm:$0xff]
    %v292 = vld [vmem:[#allocation6 + $0x5f8] sm:$0xff]
    %v293 = vld [vmem:[#allocation6 + $0x600] sm:$0xff]
    %v294 = vld [vmem:[#allocation6 + $0x608] sm:$0xff]
    %v295 = vld [vmem:[#allocation6 + $0x610] sm:$0xff]
    %v296 = vld [vmem:[#allocation6 + $0x618] sm:$0xff]
    %v297 = vld [vmem:[#allocation6 + $0x620] sm:$0xff]
    %v298 = vld [vmem:[#allocation6 + $0x628] sm:$0xff]
    %v299 = vld [vmem:[#allocation6 + $0x630] sm:$0xff]
    %v300 = vld [vmem:[#allocation6 + $0x638] sm:$0xff]
    %v301 = vld [vmem:[#allocation6 + $0x640] sm:$0xff]
    %v302 = vld [vmem:[#allocation6 + $0x648] sm:$0xff]
    %v303 = vld [vmem:[#allocation6 + $0x650] sm:$0xff]
    %v304 = vld [vmem:[#allocation6 + $0x658] sm:$0xff]
    %v305 = vld [vmem:[#allocation6 + $0x660] sm:$0xff]
    %v306 = vld [vmem:[#allocation6 + $0x668] sm:$0xff]
    %v307 = vld [vmem:[#allocation6 + $0x670] sm:$0xff]
    %v308 = vld [vmem:[#allocation6 + $0x678] sm:$0xff]
    %v309 = vld [vmem:[#allocation6 + $0x680] sm:$0xff]
    %v310 = vld [vmem:[#allocation6 + $0x688] sm:$0xff]
    %v311 = vld [vmem:[#allocation6 + $0x690] sm:$0xff]
    %v312 = vld [vmem:[#allocation6 + $0x698] sm:$0xff]
    %v313 = vld [vmem:[#allocation6 + $0x6a0] sm:$0xff]
    %v314 = vld [vmem:[#allocation6 + $0x6a8] sm:$0xff]
    %v315 = vld [vmem:[#allocation6 + $0x6b0] sm:$0xff]
    %v316 = vld [vmem:[#allocation6 + $0x6b8] sm:$0xff]
    %v317 = vld [vmem:[#allocation6 + $0x6c0] sm:$0xff]
    %v318 = vld [vmem:[#allocation6 + $0x6c8] sm:$0xff]
    %v319 = vld [vmem:[#allocation6 + $0x6d0] sm:$0xff]
    %v320 = vld [vmem:[#allocation6 + $0x6d8] sm:$0xff]
    %v321 = vld [vmem:[#allocation6 + $0x6e0] sm:$0xff]
    %v322 = vld [vmem:[#allocation6 + $0x6e8] sm:$0xff]
    %v323 = vld [vmem:[#allocation6 + $0x6f0] sm:$0xff]
    %v324 = vld [vmem:[#allocation6 + $0x6f8] sm:$0xff]
    %v325 = vld [vmem:[#allocation6 + $0x700] sm:$0xff]
    %v326 = vld [vmem:[#allocation6 + $0x708] sm:$0xff]
    %v327 = vld [vmem:[#allocation6 + $0x710] sm:$0xff]
    %v328 = vld [vmem:[#allocation6 + $0x718] sm:$0xff]
    %v329 = vld [vmem:[#allocation6 + $0x720] sm:$0xff]
    %v330 = vld [vmem:[#allocation6 + $0x728] sm:$0xff]
    %v331 = vld [vmem:[#allocation6 + $0x730] sm:$0xff]
    %v332 = vld [vmem:[#allocation6 + $0x738] sm:$0xff]
    %v333 = vld [vmem:[#allocation6 + $0x740] sm:$0xff]
    %v334 = vld [vmem:[#allocation6 + $0x748] sm:$0xff]
    %v335 = vld [vmem:[#allocation6 + $0x750] sm:$0xff]
    %v336 = vld [vmem:[#allocation6 + $0x758] sm:$0xff]
    %v337 = vld [vmem:[#allocation6 + $0x760] sm:$0xff]
    %v338 = vld [vmem:[#allocation6 + $0x768] sm:$0xff]
    %v339 = vld [vmem:[#allocation6 + $0x770] sm:$0xff]
    %v340 = vld [vmem:[#allocation6 + $0x778] sm:$0xff]
    %v341 = vld [vmem:[#allocation6 + $0x780] sm:$0xff]
    %v342 = vld [vmem:[#allocation6 + $0x788] sm:$0xff]
    %v343 = vld [vmem:[#allocation6 + $0x790] sm:$0xff]
    %v344 = vld [vmem:[#allocation6 + $0x798] sm:$0xff]
    %v345 = vld [vmem:[#allocation6 + $0x7a0] sm:$0xff]
    %v346 = vld [vmem:[#allocation6 + $0x7a8] sm:$0xff]
    %v347 = vld [vmem:[#allocation6 + $0x7b0] sm:$0xff]
    %v348 = vld [vmem:[#allocation6 + $0x7b8] sm:$0xff]
    %v349 = vld [vmem:[#allocation6 + $0x7c0] sm:$0xff]
    %v350 = vld [vmem:[#allocation6 + $0x7c8] sm:$0xff]
    %v351 = vld [vmem:[#allocation6 + $0x7d0] sm:$0xff]
    %v352 = vld [vmem:[#allocation6 + $0x7d8] sm:$0xff]
    %v353 = vld [vmem:[#allocation6 + $0x7e0] sm:$0xff]
    %v354 = vld [vmem:[#allocation6 + $0x7e8] sm:$0xff]
    %v355 = vld [vmem:[#allocation6 + $0x7f0] sm:$0xff]
    %v356 = vld [vmem:[#allocation6 + $0x7f8] sm:$0xff]
    %v613 = vunpack.c.l.b16 %v101
    %v614 = vunpack.c.h.b16 %v101
    %v615 = vunpack.c.l.b16 %v102
    %v616 = vunpack.c.h.b16 %v102
    %v617 = vunpack.c.l.b16 %v103
    %v618 = vunpack.c.h.b16 %v103
    %v619 = vunpack.c.l.b16 %v104
    %v620 = vunpack.c.h.b16 %v104
    %v621 = vunpack.c.l.b16 %v105
    %v622 = vunpack.c.h.b16 %v105
    %v623 = vunpack.c.l.b16 %v106
    %v624 = vunpack.c.h.b16 %v106
    %v625 = vunpack.c.l.b16 %v107
    %v626 = vunpack.c.h.b16 %v107
    %v627 = vunpack.c.l.b16 %v108
    %v628 = vunpack.c.h.b16 %v108
    %v629 = vunpack.c.l.b16 %v109
    %v630 = vunpack.c.h.b16 %v109
    %v631 = vunpack.c.l.b16 %v110
    %v632 = vunpack.c.h.b16 %v110
    %v633 = vunpack.c.l.b16 %v111
    %v634 = vunpack.c.h.b16 %v111
    %v635 = vunpack.c.l.b16 %v112
    %v636 = vunpack.c.h.b16 %v112
    %v637 = vunpack.c.l.b16 %v113
    %v638 = vunpack.c.h.b16 %v113
    %v639 = vunpack.c.l.b16 %v114
    %v640 = vunpack.c.h.b16 %v114
    %v641 = vunpack.c.l.b16 %v115
    %v642 = vunpack.c.h.b16 %v115
    %v643 = vunpack.c.l.b16 %v116
    %v644 = vunpack.c.h.b16 %v116
    %v645 = vunpack.c.l.b16 %v117
    %v646 = vunpack.c.h.b16 %v117
    %v647 = vunpack.c.l.b16 %v118
    %v648 = vunpack.c.h.b16 %v118
    %v649 = vunpack.c.l.b16 %v119
    %v650 = vunpack.c.h.b16 %v119
    %v651 = vunpack.c.l.b16 %v120
    %v652 = vunpack.c.h.b16 %v120
    %v653 = vunpack.c.l.b16 %v121
    %v654 = vunpack.c.h.b16 %v121
    %v655 = vunpack.c.l.b16 %v122
    %v656 = vunpack.c.h.b16 %v122
    %v657 = vunpack.c.l.b16 %v123
    %v658 = vunpack.c.h.b16 %v123
    %v659 = vunpack.c.l.b16 %v124
    %v660 = vunpack.c.h.b16 %v124
    %v661 = vunpack.c.l.b16 %v125
    %v662 = vunpack.c.h.b16 %v125
    %v663 = vunpack.c.l.b16 %v126
    %v664 = vunpack.c.h.b16 %v126
    %v665 = vunpack.c.l.b16 %v127
    %v666 = vunpack.c.h.b16 %v127
    %v667 = vunpack.c.l.b16 %v128
    %v668 = vunpack.c.h.b16 %v128
    %v669 = vunpack.c.l.b16 %v129
    %v670 = vunpack.c.h.b16 %v129
    %v671 = vunpack.c.l.b16 %v130
    %v672 = vunpack.c.h.b16 %v130
    %v673 = vunpack.c.l.b16 %v131
    %v674 = vunpack.c.h.b16 %v131
    %v675 = vunpack.c.l.b16 %v132
    %v676 = vunpack.c.h.b16 %v132
    %v677 = vunpack.c.l.b16 %v133
    %v678 = vunpack.c.h.b16 %v133
    %v679 = vunpack.c.l.b16 %v134
    %v680 = vunpack.c.h.b16 %v134
    %v681 = vunpack.c.l.b16 %v135
    %v682 = vunpack.c.h.b16 %v135
    %v683 = vunpack.c.l.b16 %v136
    %v684 = vunpack.c.h.b16 %v136
    %v685 = vunpack.c.l.b16 %v137
    %v686 = vunpack.c.h.b16 %v137
    %v687 = vunpack.c.l.b16 %v138
    %v688 = vunpack.c.h.b16 %v138
    %v689 = vunpack.c.l.b16 %v139
    %v690 = vunpack.c.h.b16 %v139
    %v691 = vunpack.c.l.b16 %v140
    %v692 = vunpack.c.h.b16 %v140
    %v693 = vunpack.c.l.b16 %v141
    %v694 = vunpack.c.h.b16 %v141
    %v695 = vunpack.c.l.b16 %v142
    %v696 = vunpack.c.h.b16 %v142
    %v697 = vunpack.c.l.b16 %v143
    %v698 = vunpack.c.h.b16 %v143
    %v699 = vunpack.c.l.b16 %v144
    %v700 = vunpack.c.h.b16 %v144
    %v701 = vunpack.c.l.b16 %v145
    %v702 = vunpack.c.h.b16 %v145
    %v703 = vunpack.c.l.b16 %v146
    %v704 = vunpack.c.h.b16 %v146
    %v705 = vunpack.c.l.b16 %v147
    %v706 = vunpack.c.h.b16 %v147
    %v707 = vunpack.c.l.b16 %v148
    %v708 = vunpack.c.h.b16 %v148
    %v709 = vunpack.c.l.b16 %v149
    %v710 = vunpack.c.h.b16 %v149
    %v711 = vunpack.c.l.b16 %v150
    %v712 = vunpack.c.h.b16 %v150
    %v713 = vunpack.c.l.b16 %v151
    %v714 = vunpack.c.h.b16 %v151
    %v715 = vunpack.c.l.b16 %v152
    %v716 = vunpack.c.h.b16 %v152
    %v717 = vunpack.c.l.b16 %v153
    %v718 = vunpack.c.h.b16 %v153
    %v719 = vunpack.c.l.b16 %v154
    %v720 = vunpack.c.h.b16 %v154
    %v721 = vunpack.c.l.b16 %v155
    %v722 = vunpack.c.h.b16 %v155
    %v723 = vunpack.c.l.b16 %v156
    %v724 = vunpack.c.h.b16 %v156
    %v725 = vunpack.c.l.b16 %v157
    %v726 = vunpack.c.h.b16 %v157
    %v727 = vunpack.c.l.b16 %v158
    %v728 = vunpack.c.h.b16 %v158
    %v729 = vunpack.c.l.b16 %v159
    %v730 = vunpack.c.h.b16 %v159
    %v731 = vunpack.c.l.b16 %v160
    %v732 = vunpack.c.h.b16 %v160
    %v733 = vunpack.c.l.b16 %v161
    %v734 = vunpack.c.h.b16 %v161
    %v735 = vunpack.c.l.b16 %v162
    %v736 = vunpack.c.h.b16 %v162
    %v737 = vunpack.c.l.b16 %v163
    %v738 = vunpack.c.h.b16 %v163
    %v739 = vunpack.c.l.b16 %v164
    %v740 = vunpack.c.h.b16 %v164
    %v741 = vunpack.c.l.b16 %v165
    %v742 = vunpack.c.h.b16 %v165
    %v743 = vunpack.c.l.b16 %v166
    %v744 = vunpack.c.h.b16 %v166
    %v745 = vunpack.c.l.b16 %v167
    %v746 = vunpack.c.h.b16 %v167
    %v747 = vunpack.c.l.b16 %v168
    %v748 = vunpack.c.h.b16 %v168
    %v749 = vunpack.c.l.b16 %v169
    %v750 = vunpack.c.h.b16 %v169
    %v751 = vunpack.c.l.b16 %v170
    %v752 = vunpack.c.h.b16 %v170
    %v753 = vunpack.c.l.b16 %v171
    %v754 = vunpack.c.h.b16 %v171
    %v755 = vunpack.c.l.b16 %v172
    %v756 = vunpack.c.h.b16 %v172
    %v757 = vunpack.c.l.b16 %v173
    %v758 = vunpack.c.h.b16 %v173
    %v759 = vunpack.c.l.b16 %v174
    %v760 = vunpack.c.h.b16 %v174
    %v761 = vunpack.c.l.b16 %v175
    %v762 = vunpack.c.h.b16 %v175
    %v763 = vunpack.c.l.b16 %v176
    %v764 = vunpack.c.h.b16 %v176
    %v765 = vunpack.c.l.b16 %v177
    %v766 = vunpack.c.h.b16 %v177
    %v767 = vunpack.c.l.b16 %v178
    %v768 = vunpack.c.h.b16 %v178
    %v769 = vunpack.c.l.b16 %v179
    %v770 = vunpack.c.h.b16 %v179
    %v771 = vunpack.c.l.b16 %v180
    %v772 = vunpack.c.h.b16 %v180
    %v773 = vunpack.c.l.b16 %v181
    %v774 = vunpack.c.h.b16 %v181
    %v775 = vunpack.c.l.b16 %v182
    %v776 = vunpack.c.h.b16 %v182
    %v777 = vunpack.c.l.b16 %v183
    %v778 = vunpack.c.h.b16 %v183
    %v779 = vunpack.c.l.b16 %v184
    %v780 = vunpack.c.h.b16 %v184
    %v781 = vunpack.c.l.b16 %v185
    %v782 = vunpack.c.h.b16 %v185
    %v783 = vunpack.c.l.b16 %v186
    %v784 = vunpack.c.h.b16 %v186
    %v785 = vunpack.c.l.b16 %v187
    %v786 = vunpack.c.h.b16 %v187
    %v787 = vunpack.c.l.b16 %v188
    %v788 = vunpack.c.h.b16 %v188
    %v789 = vunpack.c.l.b16 %v189
    %v790 = vunpack.c.h.b16 %v189
    %v791 = vunpack.c.l.b16 %v190
    %v792 = vunpack.c.h.b16 %v190
    %v793 = vunpack.c.l.b16 %v191
    %v794 = vunpack.c.h.b16 %v191
    %v795 = vunpack.c.l.b16 %v192
    %v796 = vunpack.c.h.b16 %v192
    %v797 = vunpack.c.l.b16 %v193
    %v798 = vunpack.c.h.b16 %v193
    %v799 = vunpack.c.l.b16 %v194
    %v800 = vunpack.c.h.b16 %v194
    %v801 = vunpack.c.l.b16 %v195
    %v802 = vunpack.c.h.b16 %v195
    %v803 = vunpack.c.l.b16 %v196
    %v804 = vunpack.c.h.b16 %v196
    %v805 = vunpack.c.l.b16 %v197
    %v806 = vunpack.c.h.b16 %v197
    %v807 = vunpack.c.l.b16 %v198
    %v808 = vunpack.c.h.b16 %v198
    %v809 = vunpack.c.l.b16 %v199
    %v810 = vunpack.c.h.b16 %v199
    %v811 = vunpack.c.l.b16 %v200
    %v812 = vunpack.c.h.b16 %v200
    %v813 = vunpack.c.l.b16 %v201
    %v814 = vunpack.c.h.b16 %v201
    %v815 = vunpack.c.l.b16 %v202
    %v816 = vunpack.c.h.b16 %v202
    %v817 = vunpack.c.l.b16 %v203
    %v818 = vunpack.c.h.b16 %v203
    %v819 = vunpack.c.l.b16 %v204
    %v820 = vunpack.c.h.b16 %v204
    %v821 = vunpack.c.l.b16 %v205
    %v822 = vunpack.c.h.b16 %v205
    %v823 = vunpack.c.l.b16 %v206
    %v824 = vunpack.c.h.b16 %v206
    %v825 = vunpack.c.l.b16 %v207
    %v826 = vunpack.c.h.b16 %v207
    %v827 = vunpack.c.l.b16 %v208
    %v828 = vunpack.c.h.b16 %v208
    %v829 = vunpack.c.l.b16 %v209
    %v830 = vunpack.c.h.b16 %v209
    %v831 = vunpack.c.l.b16 %v210
    %v832 = vunpack.c.h.b16 %v210
    %v833 = vunpack.c.l.b16 %v211
    %v834 = vunpack.c.h.b16 %v211
    %v835 = vunpack.c.l.b16 %v212
    %v836 = vunpack.c.h.b16 %v212
    %v837 = vunpack.c.l.b16 %v213
    %v838 = vunpack.c.h.b16 %v213
    %v839 = vunpack.c.l.b16 %v214
    %v840 = vunpack.c.h.b16 %v214
    %v841 = vunpack.c.l.b16 %v215
    %v842 = vunpack.c.h.b16 %v215
    %v843 = vunpack.c.l.b16 %v216
    %v844 = vunpack.c.h.b16 %v216
    %v845 = vunpack.c.l.b16 %v217
    %v846 = vunpack.c.h.b16 %v217
    %v847 = vunpack.c.l.b16 %v218
    %v848 = vunpack.c.h.b16 %v218
    %v849 = vunpack.c.l.b16 %v219
    %v850 = vunpack.c.h.b16 %v219
    %v851 = vunpack.c.l.b16 %v220
    %v852 = vunpack.c.h.b16 %v220
    %v853 = vunpack.c.l.b16 %v221
    %v854 = vunpack.c.h.b16 %v221
    %v855 = vunpack.c.l.b16 %v222
    %v856 = vunpack.c.h.b16 %v222
    %v857 = vunpack.c.l.b16 %v223
    %v858 = vunpack.c.h.b16 %v223
    %v859 = vunpack.c.l.b16 %v224
    %v860 = vunpack.c.h.b16 %v224
    %v861 = vunpack.c.l.b16 %v225
    %v862 = vunpack.c.h.b16 %v225
    %v863 = vunpack.c.l.b16 %v226
    %v864 = vunpack.c.h.b16 %v226
    %v865 = vunpack.c.l.b16 %v227
    %v866 = vunpack.c.h.b16 %v227
    %v867 = vunpack.c.l.b16 %v228
    %v868 = vunpack.c.h.b16 %v228
    %v869 = vunpack.c.l.b16 %v229
    %v870 = vunpack.c.h.b16 %v229
    %v871 = vunpack.c.l.b16 %v230
    %v872 = vunpack.c.h.b16 %v230
    %v873 = vunpack.c.l.b16 %v231
    %v874 = vunpack.c.h.b16 %v231
    %v875 = vunpack.c.l.b16 %v232
    %v876 = vunpack.c.h.b16 %v232
    %v877 = vunpack.c.l.b16 %v233
    %v878 = vunpack.c.h.b16 %v233
    %v879 = vunpack.c.l.b16 %v234
    %v880 = vunpack.c.h.b16 %v234
    %v881 = vunpack.c.l.b16 %v235
    %v882 = vunpack.c.h.b16 %v235
    %v883 = vunpack.c.l.b16 %v236
    %v884 = vunpack.c.h.b16 %v236
    %v885 = vunpack.c.l.b16 %v237
    %v886 = vunpack.c.h.b16 %v237
    %v887 = vunpack.c.l.b16 %v238
    %v888 = vunpack.c.h.b16 %v238
    %v889 = vunpack.c.l.b16 %v239
    %v890 = vunpack.c.h.b16 %v239
    %v891 = vunpack.c.l.b16 %v240
    %v892 = vunpack.c.h.b16 %v240
    %v893 = vunpack.c.l.b16 %v241
    %v894 = vunpack.c.h.b16 %v241
    %v895 = vunpack.c.l.b16 %v242
    %v896 = vunpack.c.h.b16 %v242
    %v897 = vunpack.c.l.b16 %v243
    %v898 = vunpack.c.h.b16 %v243
    %v899 = vunpack.c.l.b16 %v244
    %v900 = vunpack.c.h.b16 %v244
    %v901 = vunpack.c.l.b16 %v245
    %v902 = vunpack.c.h.b16 %v245
    %v903 = vunpack.c.l.b16 %v246
    %v904 = vunpack.c.h.b16 %v246
    %v905 = vunpack.c.l.b16 %v247
    %v906 = vunpack.c.h.b16 %v247
    %v907 = vunpack.c.l.b16 %v248
    %v908 = vunpack.c.h.b16 %v248
    %v909 = vunpack.c.l.b16 %v249
    %v910 = vunpack.c.h.b16 %v249
    %v911 = vunpack.c.l.b16 %v250
    %v912 = vunpack.c.h.b16 %v250
    %v913 = vunpack.c.l.b16 %v251
    %v914 = vunpack.c.h.b16 %v251
    %v915 = vunpack.c.l.b16 %v252
    %v916 = vunpack.c.h.b16 %v252
    %v917 = vunpack.c.l.b16 %v253
    %v918 = vunpack.c.h.b16 %v253
    %v919 = vunpack.c.l.b16 %v254
    %v920 = vunpack.c.h.b16 %v254
    %v921 = vunpack.c.l.b16 %v255
    %v922 = vunpack.c.h.b16 %v255
    %v923 = vunpack.c.l.b16 %v256
    %v924 = vunpack.c.h.b16 %v256
    %v925 = vunpack.c.l.b16 %v257
    %v926 = vunpack.c.h.b16 %v257
    %v927 = vunpack.c.l.b16 %v258
    %v928 = vunpack.c.h.b16 %v258
    %v929 = vunpack.c.l.b16 %v259
    %v930 = vunpack.c.h.b16 %v259
    %v931 = vunpack.c.l.b16 %v260
    %v932 = vunpack.c.h.b16 %v260
    %v933 = vunpack.c.l.b16 %v261
    %v934 = vunpack.c.h.b16 %v261
    %v935 = vunpack.c.l.b16 %v262
    %v936 = vunpack.c.h.b16 %v262
    %v937 = vunpack.c.l.b16 %v263
    %v938 = vunpack.c.h.b16 %v263
    %v939 = vunpack.c.l.b16 %v264
    %v940 = vunpack.c.h.b16 %v264
    %v941 = vunpack.c.l.b16 %v265
    %v942 = vunpack.c.h.b16 %v265
    %v943 = vunpack.c.l.b16 %v266
    %v944 = vunpack.c.h.b16 %v266
    %v945 = vunpack.c.l.b16 %v267
    %v946 = vunpack.c.h.b16 %v267
    %v947 = vunpack.c.l.b16 %v268
    %v948 = vunpack.c.h.b16 %v268
    %v949 = vunpack.c.l.b16 %v269
    %v950 = vunpack.c.h.b16 %v269
    %v951 = vunpack.c.l.b16 %v270
    %v952 = vunpack.c.h.b16 %v270
    %v953 = vunpack.c.l.b16 %v271
    %v954 = vunpack.c.h.b16 %v271
    %v955 = vunpack.c.l.b16 %v272
    %v956 = vunpack.c.h.b16 %v272
    %v957 = vunpack.c.l.b16 %v273
    %v958 = vunpack.c.h.b16 %v273
    %v959 = vunpack.c.l.b16 %v274
    %v960 = vunpack.c.h.b16 %v274
    %v961 = vunpack.c.l.b16 %v275
    %v962 = vunpack.c.h.b16 %v275
    %v963 = vunpack.c.l.b16 %v276
    %v964 = vunpack.c.h.b16 %v276
    %v965 = vunpack.c.l.b16 %v277
    %v966 = vunpack.c.h.b16 %v277
    %v967 = vunpack.c.l.b16 %v278
    %v968 = vunpack.c.h.b16 %v278
    %v969 = vunpack.c.l.b16 %v279
    %v970 = vunpack.c.h.b16 %v279
    %v971 = vunpack.c.l.b16 %v280
    %v972 = vunpack.c.h.b16 %v280
    %v973 = vunpack.c.l.b16 %v281
    %v974 = vunpack.c.h.b16 %v281
    %v975 = vunpack.c.l.b16 %v282
    %v976 = vunpack.c.h.b16 %v282
    %v977 = vunpack.c.l.b16 %v283
    %v978 = vunpack.c.h.b16 %v283
    %v979 = vunpack.c.l.b16 %v284
    %v980 = vunpack.c.h.b16 %v284
    %v981 = vunpack.c.l.b16 %v285
    %v982 = vunpack.c.h.b16 %v285
    %v983 = vunpack.c.l.b16 %v286
    %v984 = vunpack.c.h.b16 %v286
    %v985 = vunpack.c.l.b16 %v287
    %v986 = vunpack.c.h.b16 %v287
    %v987 = vunpack.c.l.b16 %v288
    %v988 = vunpack.c.h.b16 %v288
    %v989 = vunpack.c.l.b16 %v289
    %v990 = vunpack.c.h.b16 %v289
    %v991 = vunpack.c.l.b16 %v290
    %v992 = vunpack.c.h.b16 %v290
    %v993 = vunpack.c.l.b16 %v291
    %v994 = vunpack.c.h.b16 %v291
    %v995 = vunpack.c.l.b16 %v292
    %v996 = vunpack.c.h.b16 %v292
    %v997 = vunpack.c.l.b16 %v293
    %v998 = vunpack.c.h.b16 %v293
    %v999 = vunpack.c.l.b16 %v294
    %v1000 = vunpack.c.h.b16 %v294
    %v1001 = vunpack.c.l.b16 %v295
    %v1002 = vunpack.c.h.b16 %v295
    %v1003 = vunpack.c.l.b16 %v296
    %v1004 = vunpack.c.h.b16 %v296
    %v1005 = vunpack.c.l.b16 %v297
    %v1006 = vunpack.c.h.b16 %v297
    %v1007 = vunpack.c.l.b16 %v298
    %v1008 = vunpack.c.h.b16 %v298
    %v1009 = vunpack.c.l.b16 %v299
    %v1010 = vunpack.c.h.b16 %v299
    %v1011 = vunpack.c.l.b16 %v300
    %v1012 = vunpack.c.h.b16 %v300
    %v1013 = vunpack.c.l.b16 %v301
    %v1014 = vunpack.c.h.b16 %v301
    %v1015 = vunpack.c.l.b16 %v302
    %v1016 = vunpack.c.h.b16 %v302
    %v1017 = vunpack.c.l.b16 %v303
    %v1018 = vunpack.c.h.b16 %v303
    %v1019 = vunpack.c.l.b16 %v304
    %v1020 = vunpack.c.h.b16 %v304
    %v1021 = vunpack.c.l.b16 %v305
    %v1022 = vunpack.c.h.b16 %v305
    %v1023 = vunpack.c.l.b16 %v306
    %v1024 = vunpack.c.h.b16 %v306
    %v1025 = vunpack.c.l.b16 %v307
    %v1026 = vunpack.c.h.b16 %v307
    %v1027 = vunpack.c.l.b16 %v308
    %v1028 = vunpack.c.h.b16 %v308
    %v1029 = vunpack.c.l.b16 %v309
    %v1030 = vunpack.c.h.b16 %v309
    %v1031 = vunpack.c.l.b16 %v310
    %v1032 = vunpack.c.h.b16 %v310
    %v1033 = vunpack.c.l.b16 %v311
    %v1034 = vunpack.c.h.b16 %v311
    %v1035 = vunpack.c.l.b16 %v312
    %v1036 = vunpack.c.h.b16 %v312
    %v1037 = vunpack.c.l.b16 %v313
    %v1038 = vunpack.c.h.b16 %v313
    %v1039 = vunpack.c.l.b16 %v314
    %v1040 = vunpack.c.h.b16 %v314
    %v1041 = vunpack.c.l.b16 %v315
    %v1042 = vunpack.c.h.b16 %v315
    %v1043 = vunpack.c.l.b16 %v316
    %v1044 = vunpack.c.h.b16 %v316
    %v1045 = vunpack.c.l.b16 %v317
    %v1046 = vunpack.c.h.b16 %v317
    %v1047 = vunpack.c.l.b16 %v318
    %v1048 = vunpack.c.h.b16 %v318
    %v1049 = vunpack.c.l.b16 %v319
    %v1050 = vunpack.c.h.b16 %v319
    %v1051 = vunpack.c.l.b16 %v320
    %v1052 = vunpack.c.h.b16 %v320
    %v1053 = vunpack.c.l.b16 %v321
    %v1054 = vunpack.c.h.b16 %v321
    %v1055 = vunpack.c.l.b16 %v322
    %v1056 = vunpack.c.h.b16 %v322
    %v1057 = vunpack.c.l.b16 %v323
    %v1058 = vunpack.c.h.b16 %v323
    %v1059 = vunpack.c.l.b16 %v324
    %v1060 = vunpack.c.h.b16 %v324
    %v1061 = vunpack.c.l.b16 %v325
    %v1062 = vunpack.c.h.b16 %v325
    %v1063 = vunpack.c.l.b16 %v326
    %v1064 = vunpack.c.h.b16 %v326
    %v1065 = vunpack.c.l.b16 %v327
    %v1066 = vunpack.c.h.b16 %v327
    %v1067 = vunpack.c.l.b16 %v328
    %v1068 = vunpack.c.h.b16 %v328
    %v1069 = vunpack.c.l.b16 %v329
    %v1070 = vunpack.c.h.b16 %v329
    %v1071 = vunpack.c.l.b16 %v330
    %v1072 = vunpack.c.h.b16 %v330
    %v1073 = vunpack.c.l.b16 %v331
    %v1074 = vunpack.c.h.b16 %v331
    %v1075 = vunpack.c.l.b16 %v332
    %v1076 = vunpack.c.h.b16 %v332
    %v1077 = vunpack.c.l.b16 %v333
    %v1078 = vunpack.c.h.b16 %v333
    %v1079 = vunpack.c.l.b16 %v334
    %v1080 = vunpack.c.h.b16 %v334
    %v1081 = vunpack.c.l.b16 %v335
    %v1082 = vunpack.c.h.b16 %v335
    %v1083 = vunpack.c.l.b16 %v336
    %v1084 = vunpack.c.h.b16 %v336
    %v1085 = vunpack.c.l.b16 %v337
    %v1086 = vunpack.c.h.b16 %v337
    %v1087 = vunpack.c.l.b16 %v338
    %v1088 = vunpack.c.h.b16 %v338
    %v1089 = vunpack.c.l.b16 %v339
    %v1090 = vunpack.c.h.b16 %v339
    %v1091 = vunpack.c.l.b16 %v340
    %v1092 = vunpack.c.h.b16 %v340
    %v1093 = vunpack.c.l.b16 %v341
    %v1094 = vunpack.c.h.b16 %v341
    %v1095 = vunpack.c.l.b16 %v342
    %v1096 = vunpack.c.h.b16 %v342
    %v1097 = vunpack.c.l.b16 %v343
    %v1098 = vunpack.c.h.b16 %v343
    %v1099 = vunpack.c.l.b16 %v344
    %v1100 = vunpack.c.h.b16 %v344
    %v1101 = vunpack.c.l.b16 %v345
    %v1102 = vunpack.c.h.b16 %v345
    %v1103 = vunpack.c.l.b16 %v346
    %v1104 = vunpack.c.h.b16 %v346
    %v1105 = vunpack.c.l.b16 %v347
    %v1106 = vunpack.c.h.b16 %v347
    %v1107 = vunpack.c.l.b16 %v348
    %v1108 = vunpack.c.h.b16 %v348
    %v1109 = vunpack.c.l.b16 %v349
    %v1110 = vunpack.c.h.b16 %v349
    %v1111 = vunpack.c.l.b16 %v350
    %v1112 = vunpack.c.h.b16 %v350
    %v1113 = vunpack.c.l.b16 %v351
    %v1114 = vunpack.c.h.b16 %v351
    %v1115 = vunpack.c.l.b16 %v352
    %v1116 = vunpack.c.h.b16 %v352
    %v1117 = vunpack.c.l.b16 %v353
    %v1118 = vunpack.c.h.b16 %v353
    %v1119 = vunpack.c.l.b16 %v354
    %v1120 = vunpack.c.h.b16 %v354
    %v1121 = vunpack.c.l.b16 %v355
    %v1122 = vunpack.c.h.b16 %v355
    %v1123 = vunpack.c.l.b16 %v356
    %v1124 = vunpack.c.h.b16 %v356
    %v1125 = vpack.c.b16 %v617, %v613
    %v1126 = vpack.c.b16 %v618, %v614
    %v1127 = vpack.c.b16 %v619, %v615
    %v1128 = vpack.c.b16 %v620, %v616
    %v1129 = vpack.c.b16 %v625, %v621
    %v1130 = vpack.c.b16 %v626, %v622
    %v1131 = vpack.c.b16 %v627, %v623
    %v1132 = vpack.c.b16 %v628, %v624
    %v1133 = vpack.c.b16 %v633, %v629
    %v1134 = vpack.c.b16 %v634, %v630
    %v1135 = vpack.c.b16 %v635, %v631
    %v1136 = vpack.c.b16 %v636, %v632
    %v1137 = vpack.c.b16 %v641, %v637
    %v1138 = vpack.c.b16 %v642, %v638
    %v1139 = vpack.c.b16 %v643, %v639
    %v1140 = vpack.c.b16 %v644, %v640
    %v1141 = vpack.c.b16 %v649, %v645
    %v1142 = vpack.c.b16 %v650, %v646
    %v1143 = vpack.c.b16 %v651, %v647
    %v1144 = vpack.c.b16 %v652, %v648
    %v1145 = vpack.c.b16 %v657, %v653
    %v1146 = vpack.c.b16 %v658, %v654
    %v1147 = vpack.c.b16 %v659, %v655
    %v1148 = vpack.c.b16 %v660, %v656
    %v1149 = vpack.c.b16 %v665, %v661
    %v1150 = vpack.c.b16 %v666, %v662
    %v1151 = vpack.c.b16 %v667, %v663
    %v1152 = vpack.c.b16 %v668, %v664
    %v1153 = vpack.c.b16 %v673, %v669
    %v1154 = vpack.c.b16 %v674, %v670
    %v1155 = vpack.c.b16 %v675, %v671
    %v1156 = vpack.c.b16 %v676, %v672
    %v1157 = vpack.c.b16 %v681, %v677
    %v1158 = vpack.c.b16 %v682, %v678
    %v1159 = vpack.c.b16 %v683, %v679
    %v1160 = vpack.c.b16 %v684, %v680
    %v1161 = vpack.c.b16 %v689, %v685
    %v1162 = vpack.c.b16 %v690, %v686
    %v1163 = vpack.c.b16 %v691, %v687
    %v1164 = vpack.c.b16 %v692, %v688
    %v1165 = vpack.c.b16 %v697, %v693
    %v1166 = vpack.c.b16 %v698, %v694
    %v1167 = vpack.c.b16 %v699, %v695
    %v1168 = vpack.c.b16 %v700, %v696
    %v1169 = vpack.c.b16 %v705, %v701
    %v1170 = vpack.c.b16 %v706, %v702
    %v1171 = vpack.c.b16 %v707, %v703
    %v1172 = vpack.c.b16 %v708, %v704
    %v1173 = vpack.c.b16 %v713, %v709
    %v1174 = vpack.c.b16 %v714, %v710
    %v1175 = vpack.c.b16 %v715, %v711
    %v1176 = vpack.c.b16 %v716, %v712
    %v1177 = vpack.c.b16 %v721, %v717
    %v1178 = vpack.c.b16 %v722, %v718
    %v1179 = vpack.c.b16 %v723, %v719
    %v1180 = vpack.c.b16 %v724, %v720
    %v1181 = vpack.c.b16 %v729, %v725
    %v1182 = vpack.c.b16 %v730, %v726
    %v1183 = vpack.c.b16 %v731, %v727
    %v1184 = vpack.c.b16 %v732, %v728
    %v1185 = vpack.c.b16 %v737, %v733
    %v1186 = vpack.c.b16 %v738, %v734
    %v1187 = vpack.c.b16 %v739, %v735
    %v1188 = vpack.c.b16 %v740, %v736
    %v1189 = vpack.c.b16 %v745, %v741
    %v1190 = vpack.c.b16 %v746, %v742
    %v1191 = vpack.c.b16 %v747, %v743
    %v1192 = vpack.c.b16 %v748, %v744
    %v1193 = vpack.c.b16 %v753, %v749
    %v1194 = vpack.c.b16 %v754, %v750
    %v1195 = vpack.c.b16 %v755, %v751
    %v1196 = vpack.c.b16 %v756, %v752
    %v1197 = vpack.c.b16 %v761, %v757
    %v1198 = vpack.c.b16 %v762, %v758
    %v1199 = vpack.c.b16 %v763, %v759
    %v1200 = vpack.c.b16 %v764, %v760
    %v1201 = vpack.c.b16 %v769, %v765
    %v1202 = vpack.c.b16 %v770, %v766
    %v1203 = vpack.c.b16 %v771, %v767
    %v1204 = vpack.c.b16 %v772, %v768
    %v1205 = vpack.c.b16 %v777, %v773
    %v1206 = vpack.c.b16 %v778, %v774
    %v1207 = vpack.c.b16 %v779, %v775
    %v1208 = vpack.c.b16 %v780, %v776
    %v1209 = vpack.c.b16 %v785, %v781
    %v1210 = vpack.c.b16 %v786, %v782
    %v1211 = vpack.c.b16 %v787, %v783
    %v1212 = vpack.c.b16 %v788, %v784
    %v1213 = vpack.c.b16 %v793, %v789
    %v1214 = vpack.c.b16 %v794, %v790
    %v1215 = vpack.c.b16 %v795, %v791
    %v1216 = vpack.c.b16 %v796, %v792
    %v1217 = vpack.c.b16 %v801, %v797
    %v1218 = vpack.c.b16 %v802, %v798
    %v1219 = vpack.c.b16 %v803, %v799
    %v1220 = vpack.c.b16 %v804, %v800
    %v1221 = vpack.c.b16 %v809, %v805
    %v1222 = vpack.c.b16 %v810, %v806
    %v1223 = vpack.c.b16 %v811, %v807
    %v1224 = vpack.c.b16 %v812, %v808
    %v1225 = vpack.c.b16 %v817, %v813
    %v1226 = vpack.c.b16 %v818, %v814
    %v1227 = vpack.c.b16 %v819, %v815
    %v1228 = vpack.c.b16 %v820, %v816
    %v1229 = vpack.c.b16 %v825, %v821
    %v1230 = vpack.c.b16 %v826, %v822
    %v1231 = vpack.c.b16 %v827, %v823
    %v1232 = vpack.c.b16 %v828, %v824
    %v1233 = vpack.c.b16 %v833, %v829
    %v1234 = vpack.c.b16 %v834, %v830
    %v1235 = vpack.c.b16 %v835, %v831
    %v1236 = vpack.c.b16 %v836, %v832
    %v1237 = vpack.c.b16 %v841, %v837
    %v1238 = vpack.c.b16 %v842, %v838
    %v1239 = vpack.c.b16 %v843, %v839
    %v1240 = vpack.c.b16 %v844, %v840
    %v1241 = vpack.c.b16 %v849, %v845
    %v1242 = vpack.c.b16 %v850, %v846
    %v1243 = vpack.c.b16 %v851, %v847
    %v1244 = vpack.c.b16 %v852, %v848
    %v1245 = vpack.c.b16 %v857, %v853
    %v1246 = vpack.c.b16 %v858, %v854
    %v1247 = vpack.c.b16 %v859, %v855
    %v1248 = vpack.c.b16 %v860, %v856
    %v1249 = vpack.c.b16 %v865, %v861
    %v1250 = vpack.c.b16 %v866, %v862
    %v1251 = vpack.c.b16 %v867, %v863
    %v1252 = vpack.c.b16 %v868, %v864
    %v1253 = vpack.c.b16 %v873, %v869
    %v1254 = vpack.c.b16 %v874, %v870
    %v1255 = vpack.c.b16 %v875, %v871
    %v1256 = vpack.c.b16 %v876, %v872
    %v1257 = vpack.c.b16 %v881, %v877
    %v1258 = vpack.c.b16 %v882, %v878
    %v1259 = vpack.c.b16 %v883, %v879
    %v1260 = vpack.c.b16 %v884, %v880
    %v1261 = vpack.c.b16 %v889, %v885
    %v1262 = vpack.c.b16 %v890, %v886
    %v1263 = vpack.c.b16 %v891, %v887
    %v1264 = vpack.c.b16 %v892, %v888
    %v1265 = vpack.c.b16 %v897, %v893
    %v1266 = vpack.c.b16 %v898, %v894
    %v1267 = vpack.c.b16 %v899, %v895
    %v1268 = vpack.c.b16 %v900, %v896
    %v1269 = vpack.c.b16 %v905, %v901
    %v1270 = vpack.c.b16 %v906, %v902
    %v1271 = vpack.c.b16 %v907, %v903
    %v1272 = vpack.c.b16 %v908, %v904
    %v1273 = vpack.c.b16 %v913, %v909
    %v1274 = vpack.c.b16 %v914, %v910
    %v1275 = vpack.c.b16 %v915, %v911
    %v1276 = vpack.c.b16 %v916, %v912
    %v1277 = vpack.c.b16 %v921, %v917
    %v1278 = vpack.c.b16 %v922, %v918
    %v1279 = vpack.c.b16 %v923, %v919
    %v1280 = vpack.c.b16 %v924, %v920
    %v1281 = vpack.c.b16 %v929, %v925
    %v1282 = vpack.c.b16 %v930, %v926
    %v1283 = vpack.c.b16 %v931, %v927
    %v1284 = vpack.c.b16 %v932, %v928
    %v1285 = vpack.c.b16 %v937, %v933
    %v1286 = vpack.c.b16 %v938, %v934
    %v1287 = vpack.c.b16 %v939, %v935
    %v1288 = vpack.c.b16 %v940, %v936
    %v1289 = vpack.c.b16 %v945, %v941
    %v1290 = vpack.c.b16 %v946, %v942
    %v1291 = vpack.c.b16 %v947, %v943
    %v1292 = vpack.c.b16 %v948, %v944
    %v1293 = vpack.c.b16 %v953, %v949
    %v1294 = vpack.c.b16 %v954, %v950
    %v1295 = vpack.c.b16 %v955, %v951
    %v1296 = vpack.c.b16 %v956, %v952
    %v1297 = vpack.c.b16 %v961, %v957
    %v1298 = vpack.c.b16 %v962, %v958
    %v1299 = vpack.c.b16 %v963, %v959
    %v1300 = vpack.c.b16 %v964, %v960
    %v1301 = vpack.c.b16 %v969, %v965
    %v1302 = vpack.c.b16 %v970, %v966
    %v1303 = vpack.c.b16 %v971, %v967
    %v1304 = vpack.c.b16 %v972, %v968
    %v1305 = vpack.c.b16 %v977, %v973
    %v1306 = vpack.c.b16 %v978, %v974
    %v1307 = vpack.c.b16 %v979, %v975
    %v1308 = vpack.c.b16 %v980, %v976
    %v1309 = vpack.c.b16 %v985, %v981
    %v1310 = vpack.c.b16 %v986, %v982
    %v1311 = vpack.c.b16 %v987, %v983
    %v1312 = vpack.c.b16 %v988, %v984
    %v1313 = vpack.c.b16 %v993, %v989
    %v1314 = vpack.c.b16 %v994, %v990
    %v1315 = vpack.c.b16 %v995, %v991
    %v1316 = vpack.c.b16 %v996, %v992
    %v1317 = vpack.c.b16 %v1001, %v997
    %v1318 = vpack.c.b16 %v1002, %v998
    %v1319 = vpack.c.b16 %v1003, %v999
    %v1320 = vpack.c.b16 %v1004, %v1000
    %v1321 = vpack.c.b16 %v1009, %v1005
    %v1322 = vpack.c.b16 %v1010, %v1006
    %v1323 = vpack.c.b16 %v1011, %v1007
    %v1324 = vpack.c.b16 %v1012, %v1008
    %v1325 = vpack.c.b16 %v1017, %v1013
    %v1326 = vpack.c.b16 %v1018, %v1014
    %v1327 = vpack.c.b16 %v1019, %v1015
    %v1328 = vpack.c.b16 %v1020, %v1016
    %v1329 = vpack.c.b16 %v1025, %v1021
    %v1330 = vpack.c.b16 %v1026, %v1022
    %v1331 = vpack.c.b16 %v1027, %v1023
    %v1332 = vpack.c.b16 %v1028, %v1024
    %v1333 = vpack.c.b16 %v1033, %v1029
    %v1334 = vpack.c.b16 %v1034, %v1030
    %v1335 = vpack.c.b16 %v1035, %v1031
    %v1336 = vpack.c.b16 %v1036, %v1032
    %v1337 = vpack.c.b16 %v1041, %v1037
    %v1338 = vpack.c.b16 %v1042, %v1038
    %v1339 = vpack.c.b16 %v1043, %v1039
    %v1340 = vpack.c.b16 %v1044, %v1040
    %v1341 = vpack.c.b16 %v1049, %v1045
    %v1342 = vpack.c.b16 %v1050, %v1046
    %v1343 = vpack.c.b16 %v1051, %v1047
    %v1344 = vpack.c.b16 %v1052, %v1048
    %v1345 = vpack.c.b16 %v1057, %v1053
    %v1346 = vpack.c.b16 %v1058, %v1054
    %v1347 = vpack.c.b16 %v1059, %v1055
    %v1348 = vpack.c.b16 %v1060, %v1056
    %v1349 = vpack.c.b16 %v1065, %v1061
    %v1350 = vpack.c.b16 %v1066, %v1062
    %v1351 = vpack.c.b16 %v1067, %v1063
    %v1352 = vpack.c.b16 %v1068, %v1064
    %v1353 = vpack.c.b16 %v1073, %v1069
    %v1354 = vpack.c.b16 %v1074, %v1070
    %v1355 = vpack.c.b16 %v1075, %v1071
    %v1356 = vpack.c.b16 %v1076, %v1072
    %v1357 = vpack.c.b16 %v1081, %v1077
    %v1358 = vpack.c.b16 %v1082, %v1078
    %v1359 = vpack.c.b16 %v1083, %v1079
    %v1360 = vpack.c.b16 %v1084, %v1080
    %v1361 = vpack.c.b16 %v1089, %v1085
    %v1362 = vpack.c.b16 %v1090, %v1086
    %v1363 = vpack.c.b16 %v1091, %v1087
    %v1364 = vpack.c.b16 %v1092, %v1088
    %v1365 = vpack.c.b16 %v1097, %v1093
    %v1366 = vpack.c.b16 %v1098, %v1094
    %v1367 = vpack.c.b16 %v1099, %v1095
    %v1368 = vpack.c.b16 %v1100, %v1096
    %v1369 = vpack.c.b16 %v1105, %v1101
    %v1370 = vpack.c.b16 %v1106, %v1102
    %v1371 = vpack.c.b16 %v1107, %v1103
    %v1372 = vpack.c.b16 %v1108, %v1104
    %v1373 = vpack.c.b16 %v1113, %v1109
    %v1374 = vpack.c.b16 %v1114, %v1110
    %v1375 = vpack.c.b16 %v1115, %v1111
    %v1376 = vpack.c.b16 %v1116, %v1112
    %v1377 = vpack.c.b16 %v1121, %v1117
    %v1378 = vpack.c.b16 %v1122, %v1118
    %v1379 = vpack.c.b16 %v1123, %v1119
    %v1380 = vpack.c.b16 %v1124, %v1120
    %1637 = vmatprep.subr.bf16.mxu0 %v1154
    %1638 = vmatpush1.bf16.msra.mxu0 %v1153
    %1639 = vmatprep.subr.bf16.mxu0 %v1150
    %1640 = vmatpush1.bf16.msra.mxu0 %v1149
    %1641 = vmatprep.subr.bf16.mxu0 %v1146
    %1642 = vmatpush1.bf16.msra.mxu0 %v1145
    %1643 = vmatprep.subr.bf16.mxu0 %v1142
    %1644 = vmatpush1.bf16.msra.mxu0 %v1141
    %1645 = vmatprep.subr.bf16.mxu0 %v1138
    %1646 = vmatpush1.bf16.msra.mxu0 %v1137
    %1647 = vmatprep.subr.bf16.mxu0 %v1134
    %1648 = vmatpush1.bf16.msra.mxu0 %v1133
    %1649 = vmatprep.subr.bf16.mxu0 %v1130
    %1650 = vmatpush1.bf16.msra.mxu0 %v1129
    %1651 = vmatprep.subr.bf16.mxu0 %v1126
    %1652 = vmatpush1.bf16.msra.mxu0 %v1125
    %1653 = vmatprep.subr.bf16.mxu0 %v1186
    %1654 = vmatpush2.bf16.msra.mxu0 %v1185
    %1655 = vmatprep.subr.bf16.mxu0 %v1182
    %1656 = vmatpush2.bf16.msra.mxu0 %v1181
    %1657 = vmatprep.subr.bf16.mxu0 %v1178
    %1658 = vmatpush2.bf16.msra.mxu0 %v1177
    %1659 = vmatprep.subr.bf16.mxu0 %v1174
    %1660 = vmatpush2.bf16.msra.mxu0 %v1173
    %1661 = vmatprep.subr.bf16.mxu0 %v1170
    %1662 = vmatpush2.bf16.msra.mxu0 %v1169
    %1663 = vmatprep.subr.bf16.mxu0 %v1166
    %1664 = vmatpush2.bf16.msra.mxu0 %v1165
    %1665 = vmatprep.subr.bf16.mxu0 %v1162
    %1666 = vmatpush2.bf16.msra.mxu0 %v1161
    %1667 = vmatprep.subr.bf16.mxu0 %v1158
    %1668 = vmatpush2.bf16.msra.mxu0 %v1157
    %1669 = vmatprep.mubr.bf16.mxu0 %v94
    %1670 = vmatmul.mubr.bf16.gmra.mxu0 %v93
    %v1671 = vpop.f32.mrf.mxu0
    %v1672 = vadd.f32 0.0, %v1671
    %v1673 = vpop.f32.mrf.mxu0
    %v1674 = vadd.f32 0.0, %v1673
    %v1675 = vpop.f32.mrf.mxu0
    %v1676 = vpop.f32.mrf.mxu0
    %1677 = vdwg.mxu0
    %1678 = vmatprep.subr.bf16.mxu0 %v1218
    %1679 = vmatpush1.bf16.msra.mxu0 %v1217
    %1680 = vmatprep.subr.bf16.mxu0 %v1214
    %1681 = vmatpush1.bf16.msra.mxu0 %v1213
    %1682 = vmatprep.subr.bf16.mxu0 %v1210
    %1683 = vmatpush1.bf16.msra.mxu0 %v1209
    %1684 = vmatprep.subr.bf16.mxu0 %v1206
    %1685 = vmatpush1.bf16.msra.mxu0 %v1205
    %1686 = vmatprep.subr.bf16.mxu0 %v1202
    %1687 = vmatpush1.bf16.msra.mxu0 %v1201
    %1688 = vmatprep.subr.bf16.mxu0 %v1198
    %1689 = vmatpush1.bf16.msra.mxu0 %v1197
    %1690 = vmatprep.subr.bf16.mxu0 %v1194
    %1691 = vmatpush1.bf16.msra.mxu0 %v1193
    %1692 = vmatprep.subr.bf16.mxu0 %v1190
    %1693 = vmatpush1.bf16.msra.mxu0 %v1189
    %1694 = vmatprep.subr.bf16.mxu0 %v1250
    %1695 = vmatpush2.bf16.msra.mxu0 %v1249
    %1696 = vmatprep.subr.bf16.mxu0 %v1246
    %1697 = vmatpush2.bf16.msra.mxu0 %v1245
    %1698 = vmatprep.subr.bf16.mxu0 %v1242
    %1699 = vmatpush2.bf16.msra.mxu0 %v1241
    %1700 = vmatprep.subr.bf16.mxu0 %v1238
    %1701 = vmatpush2.bf16.msra.mxu0 %v1237
    %1702 = vmatprep.subr.bf16.mxu0 %v1234
    %1703 = vmatpush2.bf16.msra.mxu0 %v1233
    %1704 = vmatprep.subr.bf16.mxu0 %v1230
    %1705 = vmatpush2.bf16.msra.mxu0 %v1229
    %1706 = vmatprep.subr.bf16.mxu0 %v1226
    %1707 = vmatpush2.bf16.msra.mxu0 %v1225
    %1708 = vmatprep.subr.bf16.mxu0 %v1222
    %1709 = vmatpush2.bf16.msra.mxu0 %v1221
    %1710 = vmatprep.mubr.bf16.mxu0 %v96
    %1711 = vmatmul.mubr.bf16.gmra.mxu0 %v95
    %v1712 = vpop.f32.mrf.mxu0
    %v1713 = vadd.f32 %v1672, %v1712
    %v1714 = vpop.f32.mrf.mxu0
    %v1715 = vadd.f32 %v1674, %v1714
    %v1716 = vpop.f32.mrf.mxu0
    %v1717 = vpop.f32.mrf.mxu0
    %1718 = vdwg.mxu0
    %1719 = vmatprep.subr.bf16.mxu0 %v1282
    %1720 = vmatpush1.bf16.msra.mxu0 %v1281
    %1721 = vmatprep.subr.bf16.mxu0 %v1278
    %1722 = vmatpush1.bf16.msra.mxu0 %v1277
    %1723 = vmatprep.subr.bf16.mxu0 %v1274
    %1724 = vmatpush1.bf16.msra.mxu0 %v1273
    %1725 = vmatprep.subr.bf16.mxu0 %v1270
    %1726 = vmatpush1.bf16.msra.mxu0 %v1269
    %1727 = vmatprep.subr.bf16.mxu0 %v1266
    %1728 = vmatpush1.bf16.msra.mxu0 %v1265
    %1729 = vmatprep.subr.bf16.mxu0 %v1262
    %1730 = vmatpush1.bf16.msra.mxu0 %v1261
    %1731 = vmatprep.subr.bf16.mxu0 %v1258
    %1732 = vmatpush1.bf16.msra.mxu0 %v1257
    %1733 = vmatprep.subr.bf16.mxu0 %v1254
    %1734 = vmatpush1.bf16.msra.mxu0 %v1253
    %1735 = vmatprep.subr.bf16.mxu0 %v1314
    %1736 = vmatpush2.bf16.msra.mxu0 %v1313
    %1737 = vmatprep.subr.bf16.mxu0 %v1310
    %1738 = vmatpush2.bf16.msra.mxu0 %v1309
    %1739 = vmatprep.subr.bf16.mxu0 %v1306
    %1740 = vmatpush2.bf16.msra.mxu0 %v1305
    %1741 = vmatprep.subr.bf16.mxu0 %v1302
    %1742 = vmatpush2.bf16.msra.mxu0 %v1301
    %1743 = vmatprep.subr.bf16.mxu0 %v1298
    %1744 = vmatpush2.bf16.msra.mxu0 %v1297
    %1745 = vmatprep.subr.bf16.mxu0 %v1294
    %1746 = vmatpush2.bf16.msra.mxu0 %v1293
    %1747 = vmatprep.subr.bf16.mxu0 %v1290
    %1748 = vmatpush2.bf16.msra.mxu0 %v1289
    %1749 = vmatprep.subr.bf16.mxu0 %v1286
    %1750 = vmatpush2.bf16.msra.mxu0 %v1285
    %1751 = vmatprep.mubr.bf16.mxu0 %v98
    %1752 = vmatmul.mubr.bf16.gmra.mxu0 %v97
    %v1753 = vpop.f32.mrf.mxu0
    %v1754 = vadd.f32 %v1713, %v1753
    %v1755 = vpop.f32.mrf.mxu0
    %v1756 = vadd.f32 %v1715, %v1755
    %v1757 = vpop.f32.mrf.mxu0
    %v1758 = vpop.f32.mrf.mxu0
    %1759 = vdwg.mxu0
    %1760 = vmatprep.subr.bf16.mxu0 %v1346
    %1761 = vmatpush1.bf16.msra.mxu0 %v1345
    %1762 = vmatprep.subr.bf16.mxu0 %v1342
    %1763 = vmatpush1.bf16.msra.mxu0 %v1341
    %1764 = vmatprep.subr.bf16.mxu0 %v1338
    %1765 = vmatpush1.bf16.msra.mxu0 %v1337
    %1766 = vmatprep.subr.bf16.mxu0 %v1334
    %1767 = vmatpush1.bf16.msra.mxu0 %v1333
    %1768 = vmatprep.subr.bf16.mxu0 %v1330
    %1769 = vmatpush1.bf16.msra.mxu0 %v1329
    %1770 = vmatprep.subr.bf16.mxu0 %v1326
    %1771 = vmatpush1.bf16.msra.mxu0 %v1325
    %1772 = vmatprep.subr.bf16.mxu0 %v1322
    %1773 = vmatpush1.bf16.msra.mxu0 %v1321
    %1774 = vmatprep.subr.bf16.mxu0 %v1318
    %1775 = vmatpush1.bf16.msra.mxu0 %v1317
    %1776 = vmatprep.subr.bf16.mxu0 %v1378
    %1777 = vmatpush2.bf16.msra.mxu0 %v1377
    %1778 = vmatprep.subr.bf16.mxu0 %v1374
    %1779 = vmatpush2.bf16.msra.mxu0 %v1373
    %1780 = vmatprep.subr.bf16.mxu0 %v1370
    %1781 = vmatpush2.bf16.msra.mxu0 %v1369
    %1782 = vmatprep.subr.bf16.mxu0 %v1366
    %1783 = vmatpush2.bf16.msra.mxu0 %v1365
    %1784 = vmatprep.subr.bf16.mxu0 %v1362
    %1785 = vmatpush2.bf16.msra.mxu0 %v1361
    %1786 = vmatprep.subr.bf16.mxu0 %v1358
    %1787 = vmatpush2.bf16.msra.mxu0 %v1357
    %1788 = vmatprep.subr.bf16.mxu0 %v1354
    %1789 = vmatpush2.bf16.msra.mxu0 %v1353
    %1790 = vmatprep.subr.bf16.mxu0 %v1350
    %1791 = vmatpush2.bf16.msra.mxu0 %v1349
    %1792 = vmatprep.mubr.bf16.mxu0 %v100
    %1793 = vmatmul.mubr.bf16.gmra.mxu0 %v99
    %v1794 = vpop.f32.mrf.mxu0
    %v1795 = vadd.f32 %v1754, %v1794
    %v1796 = vpop.f32.mrf.mxu0
    %v1797 = vadd.f32 %v1756, %v1796
    %v1798 = vpop.f32.mrf.mxu0
    %v1799 = vpop.f32.mrf.mxu0
    %1800 = vdwg.mxu0
    %1801 = vmatprep.subr.bf16.mxu0 %v1156
    %1802 = vmatpush1.bf16.msra.mxu0 %v1155
    %1803 = vmatprep.subr.bf16.mxu0 %v1152
    %1804 = vmatpush1.bf16.msra.mxu0 %v1151
    %1805 = vmatprep.subr.bf16.mxu0 %v1148
    %1806 = vmatpush1.bf16.msra.mxu0 %v1147
    %1807 = vmatprep.subr.bf16.mxu0 %v1144
    %1808 = vmatpush1.bf16.msra.mxu0 %v1143
    %1809 = vmatprep.subr.bf16.mxu0 %v1140
    %1810 = vmatpush1.bf16.msra.mxu0 %v1139
    %1811 = vmatprep.subr.bf16.mxu0 %v1136
    %1812 = vmatpush1.bf16.msra.mxu0 %v1135
    %1813 = vmatprep.subr.bf16.mxu0 %v1132
    %1814 = vmatpush1.bf16.msra.mxu0 %v1131
    %1815 = vmatprep.subr.bf16.mxu0 %v1128
    %1816 = vmatpush1.bf16.msra.mxu0 %v1127
    %1817 = vmatprep.subr.bf16.mxu0 %v1188
    %1818 = vmatpush2.bf16.msra.mxu0 %v1187
    %1819 = vmatprep.subr.bf16.mxu0 %v1184
    %1820 = vmatpush2.bf16.msra.mxu0 %v1183
    %1821 = vmatprep.subr.bf16.mxu0 %v1180
    %1822 = vmatpush2.bf16.msra.mxu0 %v1179
    %1823 = vmatprep.subr.bf16.mxu0 %v1176
    %1824 = vmatpush2.bf16.msra.mxu0 %v1175
    %1825 = vmatprep.subr.bf16.mxu0 %v1172
    %1826 = vmatpush2.bf16.msra.mxu0 %v1171
    %1827 = vmatprep.subr.bf16.mxu0 %v1168
    %1828 = vmatpush2.bf16.msra.mxu0 %v1167
    %1829 = vmatprep.subr.bf16.mxu0 %v1164
    %1830 = vmatpush2.bf16.msra.mxu0 %v1163
    %1831 = vmatprep.subr.bf16.mxu0 %v1160
    %1832 = vmatpush2.bf16.msra.mxu0 %v1159
    %1833 = vmatprep.mubr.bf16.mxu0 %v94
    %1834 = vmatmul.mubr.bf16.gmra.mxu0 %v93
    %v1835 = vpop.f32.mrf.mxu0
    %v1836 = vadd.f32 0.0, %v1835
    %v1837 = vpop.f32.mrf.mxu0
    %v1838 = vadd.f32 0.0, %v1837
    %v1839 = vpop.f32.mrf.mxu0
    %v1840 = vpop.f32.mrf.mxu0
    %1841 = vdwg.mxu0
    %1842 = vmatprep.subr.bf16.mxu0 %v1220
    %1843 = vmatpush1.bf16.msra.mxu0 %v1219
    %1844 = vmatprep.subr.bf16.mxu0 %v1216
    %1845 = vmatpush1.bf16.msra.mxu0 %v1215
    %1846 = vmatprep.subr.bf16.mxu0 %v1212
    %1847 = vmatpush1.bf16.msra.mxu0 %v1211
    %1848 = vmatprep.subr.bf16.mxu0 %v1208
    %1849 = vmatpush1.bf16.msra.mxu0 %v1207
    %1850 = vmatprep.subr.bf16.mxu0 %v1204
    %1851 = vmatpush1.bf16.msra.mxu0 %v1203
    %1852 = vmatprep.subr.bf16.mxu0 %v1200
    %1853 = vmatpush1.bf16.msra.mxu0 %v1199
    %1854 = vmatprep.subr.bf16.mxu0 %v1196
    %1855 = vmatpush1.bf16.msra.mxu0 %v1195
    %1856 = vmatprep.subr.bf16.mxu0 %v1192
    %1857 = vmatpush1.bf16.msra.mxu0 %v1191
    %1858 = vmatprep.subr.bf16.mxu0 %v1252
    %1859 = vmatpush2.bf16.msra.mxu0 %v1251
    %1860 = vmatprep.subr.bf16.mxu0 %v1248
    %1861 = vmatpush2.bf16.msra.mxu0 %v1247
    %1862 = vmatprep.subr.bf16.mxu0 %v1244
    %1863 = vmatpush2.bf16.msra.mxu0 %v1243
    %1864 = vmatprep.subr.bf16.mxu0 %v1240
    %1865 = vmatpush2.bf16.msra.mxu0 %v1239
    %1866 = vmatprep.subr.bf16.mxu0 %v1236
    %1867 = vmatpush2.bf16.msra.mxu0 %v1235
    %1868 = vmatprep.subr.bf16.mxu0 %v1232
    %1869 = vmatpush2.bf16.msra.mxu0 %v1231
    %1870 = vmatprep.subr.bf16.mxu0 %v1228
    %1871 = vmatpush2.bf16.msra.mxu0 %v1227
    %1872 = vmatprep.subr.bf16.mxu0 %v1224
    %1873 = vmatpush2.bf16.msra.mxu0 %v1223
    %1874 = vmatprep.mubr.bf16.mxu0 %v96
    %1875 = vmatmul.mubr.bf16.gmra.mxu0 %v95
    %v1876 = vpop.f32.mrf.mxu0
    %v1877 = vadd.f32 %v1836, %v1876
    %v1878 = vpop.f32.mrf.mxu0
    %v1879 = vadd.f32 %v1838, %v1878
    %v1880 = vpop.f32.mrf.mxu0
    %v1881 = vpop.f32.mrf.mxu0
    %1882 = vdwg.mxu0
    %1883 = vmatprep.subr.bf16.mxu0 %v1284
    %1884 = vmatpush1.bf16.msra.mxu0 %v1283
    %1885 = vmatprep.subr.bf16.mxu0 %v1280
    %1886 = vmatpush1.bf16.msra.mxu0 %v1279
    %1887 = vmatprep.subr.bf16.mxu0 %v1276
    %1888 = vmatpush1.bf16.msra.mxu0 %v1275
    %1889 = vmatprep.subr.bf16.mxu0 %v1272
    %1890 = vmatpush1.bf16.msra.mxu0 %v1271
    %1891 = vmatprep.subr.bf16.mxu0 %v1268
    %1892 = vmatpush1.bf16.msra.mxu0 %v1267
    %1893 = vmatprep.subr.bf16.mxu0 %v1264
    %1894 = vmatpush1.bf16.msra.mxu0 %v1263
    %1895 = vmatprep.subr.bf16.mxu0 %v1260
    %1896 = vmatpush1.bf16.msra.mxu0 %v1259
    %1897 = vmatprep.subr.bf16.mxu0 %v1256
    %1898 = vmatpush1.bf16.msra.mxu0 %v1255
    %1899 = vmatprep.subr.bf16.mxu0 %v1316
    %1900 = vmatpush2.bf16.msra.mxu0 %v1315
    %1901 = vmatprep.subr.bf16.mxu0 %v1312
    %1902 = vmatpush2.bf16.msra.mxu0 %v1311
    %1903 = vmatprep.subr.bf16.mxu0 %v1308
    %1904 = vmatpush2.bf16.msra.mxu0 %v1307
    %1905 = vmatprep.subr.bf16.mxu0 %v1304
    %1906 = vmatpush2.bf16.msra.mxu0 %v1303
    %1907 = vmatprep.subr.bf16.mxu0 %v1300
    %1908 = vmatpush2.bf16.msra.mxu0 %v1299
    %1909 = vmatprep.subr.bf16.mxu0 %v1296
    %1910 = vmatpush2.bf16.msra.mxu0 %v1295
    %1911 = vmatprep.subr.bf16.mxu0 %v1292
    %1912 = vmatpush2.bf16.msra.mxu0 %v1291
    %1913 = vmatprep.subr.bf16.mxu0 %v1288
    %1914 = vmatpush2.bf16.msra.mxu0 %v1287
    %1915 = vmatprep.mubr.bf16.mxu0 %v98
    %1916 = vmatmul.mubr.bf16.gmra.mxu0 %v97
    %v1917 = vpop.f32.mrf.mxu0
    %v1918 = vadd.f32 %v1877, %v1917
    %v1919 = vpop.f32.mrf.mxu0
    %v1920 = vadd.f32 %v1879, %v1919
    %v1921 = vpop.f32.mrf.mxu0
    %v1922 = vpop.f32.mrf.mxu0
    %1923 = vdwg.mxu0
    %1924 = vmatprep.subr.bf16.mxu0 %v1348
    %1925 = vmatpush1.bf16.msra.mxu0 %v1347
    %1926 = vmatprep.subr.bf16.mxu0 %v1344
    %1927 = vmatpush1.bf16.msra.mxu0 %v1343
    %1928 = vmatprep.subr.bf16.mxu0 %v1340
    %1929 = vmatpush1.bf16.msra.mxu0 %v1339
    %1930 = vmatprep.subr.bf16.mxu0 %v1336
    %1931 = vmatpush1.bf16.msra.mxu0 %v1335
    %1932 = vmatprep.subr.bf16.mxu0 %v1332
    %1933 = vmatpush1.bf16.msra.mxu0 %v1331
    %1934 = vmatprep.subr.bf16.mxu0 %v1328
    %1935 = vmatpush1.bf16.msra.mxu0 %v1327
    %1936 = vmatprep.subr.bf16.mxu0 %v1324
    %1937 = vmatpush1.bf16.msra.mxu0 %v1323
    %1938 = vmatprep.subr.bf16.mxu0 %v1320
    %1939 = vmatpush1.bf16.msra.mxu0 %v1319
    %1940 = vmatprep.subr.bf16.mxu0 %v1380
    %1941 = vmatpush2.bf16.msra.mxu0 %v1379
    %1942 = vmatprep.subr.bf16.mxu0 %v1376
    %1943 = vmatpush2.bf16.msra.mxu0 %v1375
    %1944 = vmatprep.subr.bf16.mxu0 %v1372
    %1945 = vmatpush2.bf16.msra.mxu0 %v1371
    %1946 = vmatprep.subr.bf16.mxu0 %v1368
    %1947 = vmatpush2.bf16.msra.mxu0 %v1367
    %1948 = vmatprep.subr.bf16.mxu0 %v1364
    %1949 = vmatpush2.bf16.msra.mxu0 %v1363
    %1950 = vmatprep.subr.bf16.mxu0 %v1360
    %1951 = vmatpush2.bf16.msra.mxu0 %v1359
    %1952 = vmatprep.subr.bf16.mxu0 %v1356
    %1953 = vmatpush2.bf16.msra.mxu0 %v1355
    %1954 = vmatprep.subr.bf16.mxu0 %v1352
    %1955 = vmatpush2.bf16.msra.mxu0 %v1351
    %1956 = vmatprep.mubr.bf16.mxu0 %v100
    %1957 = vmatmul.mubr.bf16.gmra.mxu0 %v99
    %v1958 = vpop.f32.mrf.mxu0
    %v1959 = vadd.f32 %v1918, %v1958
    %v1960 = vpop.f32.mrf.mxu0
    %v1961 = vadd.f32 %v1920, %v1960
    %v1962 = vpop.f32.mrf.mxu0
    %v1963 = vpop.f32.mrf.mxu0
    %1964 = vdwg.mxu0
    %v1965 = vadd.f32 %v81, %v1795
    %v1966 = vadd.f32 %v82, %v1797
    %v1967 = vadd.f32 %v83, %v1959
    %v1968 = vadd.f32 %v84, %v1961
    %1969 = vst [vmem:[#allocation2] sm:$0xff] %v1965
    %1970 = vst [vmem:[#allocation2 + $0x8] sm:$0xff] %v1966
    %1971 = vst [vmem:[#allocation2 + $0x10] sm:$0xff] %v1967
    %1972 = vst [vmem:[#allocation2 + $0x18] sm:$0xff] %v1968
    // Predicated region
    $region42: #{tpu_custom_call.1} parent=1 // pred_check
      %p1973 = pneg %p73
    $region43: #{tpu_custom_call.1} parent=1 // pred_check_branch
      %1975 = sbr.rel (%p1973) target = $region45
    $region44: #{tpu_custom_call.1} parent=1 // pred_region
      %v1976 = vld [vmem:[#allocation2] sm:$0xff]
      %v1977 = vld [vmem:[#allocation2 + $0x8] sm:$0xff]
      %v1978 = vld [vmem:[#allocation2 + $0x10] sm:$0xff]
      %v1979 = vld [vmem:[#allocation2 + $0x18] sm:$0xff]
      %v1980 = vld [vmem:[#allocation8] sm:$0xf]
      %v1982 = vlaneseq
      %v1983 = vshrl.u32 %v1982, 7
      %v1984 = vsub.s32 0, %v1983
      %v1985 = vrot.slane %v1980, %v1984
      %v1986 = vlaneseq
      %v1987 = vshrl.u32 %v1986, 7
      %v1988 = vsub.s32 1, %v1987
      %v1989 = vrot.slane %v1980, %v1988
      %v1990 = vlaneseq
      %v1991 = vshrl.u32 %v1990, 7
      %v1992 = vsub.s32 2, %v1991
      %v1993 = vrot.slane %v1980, %v1992
      %v1994 = vlaneseq
      %v1995 = vshrl.u32 %v1994, 7
      %v1996 = vsub.s32 3, %v1995
      %v1997 = vrot.slane %v1980, %v1996
      %v2002 = vadd.f32 %v1976, %v1985
      %v2003 = vadd.f32 %v1977, %v1989
      %v2004 = vadd.f32 %v1978, %v1993
      %v2005 = vadd.f32 %v1979, %v1997
      %v2006 = vmax.f32 %v2002, 0.0
      %v2007 = vmax.f32 %v2003, 0.0
      %v2008 = vmax.f32 %v2004, 0.0
      %v2009 = vmax.f32 %v2005, 0.0
      %v2010 = vpack.c.bf16 %v2006, %v2006
      %v2011 = vpack.c.bf16 %v2007, %v2007
      %v2012 = vpack.c.bf16 %v2008, %v2008
      %v2013 = vpack.c.bf16 %v2009, %v2009
      %v2014 = vld [vmem:[#allocation9] sm:$0xf]
      %v2015 = vld [vmem:[#allocation9 + $0x4] sm:$0xf]
      %v2016 = vld [vmem:[#allocation9 + $0x8] sm:$0xf]
      %v2017 = vld [vmem:[#allocation9 + $0xc] sm:$0xf]
      %v2018 = vld [vmem:[#allocation9 + $0x10] sm:$0xf]
      %v2019 = vld [vmem:[#allocation9 + $0x14] sm:$0xf]
      %v2020 = vld [vmem:[#allocation9 + $0x18] sm:$0xf]
      %v2021 = vld [vmem:[#allocation9 + $0x1c] sm:$0xf]
      %v2022 = vld [vmem:[#allocation9 + $0x20] sm:$0xf]
      %v2023 = vld [vmem:[#allocation9 + $0x24] sm:$0xf]
      %v2024 = vld [vmem:[#allocation9 + $0x28] sm:$0xf]
      %v2025 = vld [vmem:[#allocation9 + $0x2c] sm:$0xf]
      %v2026 = vld [vmem:[#allocation9 + $0x30] sm:$0xf]
      %v2027 = vld [vmem:[#allocation9 + $0x34] sm:$0xf]
      %v2028 = vld [vmem:[#allocation9 + $0x38] sm:$0xf]
      %v2029 = vld [vmem:[#allocation9 + $0x3c] sm:$0xf]
      %v2030 = vld [vmem:[#allocation9 + $0x40] sm:$0xf]
      %v2031 = vld [vmem:[#allocation9 + $0x44] sm:$0xf]
      %v2032 = vld [vmem:[#allocation9 + $0x48] sm:$0xf]
      %v2033 = vld [vmem:[#allocation9 + $0x4c] sm:$0xf]
      %v2034 = vld [vmem:[#allocation9 + $0x50] sm:$0xf]
      %v2035 = vld [vmem:[#allocation9 + $0x54] sm:$0xf]
      %v2036 = vld [vmem:[#allocation9 + $0x58] sm:$0xf]
      %v2037 = vld [vmem:[#allocation9 + $0x5c] sm:$0xf]
      %v2038 = vld [vmem:[#allocation9 + $0x60] sm:$0xf]
      %v2039 = vld [vmem:[#allocation9 + $0x64] sm:$0xf]
      %v2040 = vld [vmem:[#allocation9 + $0x68] sm:$0xf]
      %v2041 = vld [vmem:[#allocation9 + $0x6c] sm:$0xf]
      %v2042 = vld [vmem:[#allocation9 + $0x70] sm:$0xf]
      %v2043 = vld [vmem:[#allocation9 + $0x74] sm:$0xf]
      %v2044 = vld [vmem:[#allocation9 + $0x78] sm:$0xf]
      %v2045 = vld [vmem:[#allocation9 + $0x7c] sm:$0xf]
      %v2046 = vld [vmem:[#allocation9 + $0x80] sm:$0xf]
      %v2047 = vld [vmem:[#allocation9 + $0x84] sm:$0xf]
      %v2048 = vld [vmem:[#allocation9 + $0x88] sm:$0xf]
      %v2049 = vld [vmem:[#allocation9 + $0x8c] sm:$0xf]
      %v2050 = vld [vmem:[#allocation9 + $0x90] sm:$0xf]
      %v2051 = vld [vmem:[#allocation9 + $0x94] sm:$0xf]
      %v2052 = vld [vmem:[#allocation9 + $0x98] sm:$0xf]
      %v2053 = vld [vmem:[#allocation9 + $0x9c] sm:$0xf]
      %v2054 = vld [vmem:[#allocation9 + $0xa0] sm:$0xf]
      %v2055 = vld [vmem:[#allocation9 + $0xa4] sm:$0xf]
      %v2056 = vld [vmem:[#allocation9 + $0xa8] sm:$0xf]
      %v2057 = vld [vmem:[#allocation9 + $0xac] sm:$0xf]
      %v2058 = vld [vmem:[#allocation9 + $0xb0] sm:$0xf]
      %v2059 = vld [vmem:[#allocation9 + $0xb4] sm:$0xf]
      %v2060 = vld [vmem:[#allocation9 + $0xb8] sm:$0xf]
      %v2061 = vld [vmem:[#allocation9 + $0xbc] sm:$0xf]
      %v2062 = vld [vmem:[#allocation9 + $0xc0] sm:$0xf]
      %v2063 = vld [vmem:[#allocation9 + $0xc4] sm:$0xf]
      %v2064 = vld [vmem:[#allocation9 + $0xc8] sm:$0xf]
      %v2065 = vld [vmem:[#allocation9 + $0xcc] sm:$0xf]
      %v2066 = vld [vmem:[#allocation9 + $0xd0] sm:$0xf]
      %v2067 = vld [vmem:[#allocation9 + $0xd4] sm:$0xf]
      %v2068 = vld [vmem:[#allocation9 + $0xd8] sm:$0xf]
      %v2069 = vld [vmem:[#allocation9 + $0xdc] sm:$0xf]
      %v2070 = vld [vmem:[#allocation9 + $0xe0] sm:$0xf]
      %v2071 = vld [vmem:[#allocation9 + $0xe4] sm:$0xf]
      %v2072 = vld [vmem:[#allocation9 + $0xe8] sm:$0xf]
      %v2073 = vld [vmem:[#allocation9 + $0xec] sm:$0xf]
      %v2074 = vld [vmem:[#allocation9 + $0xf0] sm:$0xf]
      %v2075 = vld [vmem:[#allocation9 + $0xf4] sm:$0xf]
      %v2076 = vld [vmem:[#allocation9 + $0xf8] sm:$0xf]
      %v2077 = vld [vmem:[#allocation9 + $0xfc] sm:$0xf]
      %v2078 = vld [vmem:[%s4] sm:$0x1]
      %v2080 = vlaneseq
      %v2081 = vshrl.u32 %v2080, 7
      %v2082 = vsub.s32 0, %v2081
      %v2083 = vrot.slane %v2078, %v2082
      %v2149 = vunpack.c.l.b16 %v2014
      %v2150 = vunpack.c.l.b16 %v2015
      %v2151 = vunpack.c.l.b16 %v2016
      %v2152 = vunpack.c.l.b16 %v2017
      %v2153 = vunpack.c.l.b16 %v2018
      %v2154 = vunpack.c.l.b16 %v2019
      %v2155 = vunpack.c.l.b16 %v2020
      %v2156 = vunpack.c.l.b16 %v2021
      %v2157 = vunpack.c.l.b16 %v2022
      %v2158 = vunpack.c.l.b16 %v2023
      %v2159 = vunpack.c.l.b16 %v2024
      %v2160 = vunpack.c.l.b16 %v2025
      %v2161 = vunpack.c.l.b16 %v2026
      %v2162 = vunpack.c.l.b16 %v2027
      %v2163 = vunpack.c.l.b16 %v2028
      %v2164 = vunpack.c.l.b16 %v2029
      %v2165 = vunpack.c.l.b16 %v2030
      %v2166 = vunpack.c.l.b16 %v2031
      %v2167 = vunpack.c.l.b16 %v2032
      %v2168 = vunpack.c.l.b16 %v2033
      %v2169 = vunpack.c.l.b16 %v2034
      %v2170 = vunpack.c.l.b16 %v2035
      %v2171 = vunpack.c.l.b16 %v2036
      %v2172 = vunpack.c.l.b16 %v2037
      %v2173 = vunpack.c.l.b16 %v2038
      %v2174 = vunpack.c.l.b16 %v2039
      %v2175 = vunpack.c.l.b16 %v2040
      %v2176 = vunpack.c.l.b16 %v2041
      %v2177 = vunpack.c.l.b16 %v2042
      %v2178 = vunpack.c.l.b16 %v2043
      %v2179 = vunpack.c.l.b16 %v2044
      %v2180 = vunpack.c.l.b16 %v2045
      %v2181 = vunpack.c.l.b16 %v2046
      %v2182 = vunpack.c.l.b16 %v2047
      %v2183 = vunpack.c.l.b16 %v2048
      %v2184 = vunpack.c.l.b16 %v2049
      %v2185 = vunpack.c.l.b16 %v2050
      %v2186 = vunpack.c.l.b16 %v2051
      %v2187 = vunpack.c.l.b16 %v2052
      %v2188 = vunpack.c.l.b16 %v2053
      %v2189 = vunpack.c.l.b16 %v2054
      %v2190 = vunpack.c.l.b16 %v2055
      %v2191 = vunpack.c.l.b16 %v2056
      %v2192 = vunpack.c.l.b16 %v2057
      %v2193 = vunpack.c.l.b16 %v2058
      %v2194 = vunpack.c.l.b16 %v2059
      %v2195 = vunpack.c.l.b16 %v2060
      %v2196 = vunpack.c.l.b16 %v2061
      %v2197 = vunpack.c.l.b16 %v2062
      %v2198 = vunpack.c.l.b16 %v2063
      %v2199 = vunpack.c.l.b16 %v2064
      %v2200 = vunpack.c.l.b16 %v2065
      %v2201 = vunpack.c.l.b16 %v2066
      %v2202 = vunpack.c.l.b16 %v2067
      %v2203 = vunpack.c.l.b16 %v2068
      %v2204 = vunpack.c.l.b16 %v2069
      %v2205 = vunpack.c.l.b16 %v2070
      %v2206 = vunpack.c.l.b16 %v2071
      %v2207 = vunpack.c.l.b16 %v2072
      %v2208 = vunpack.c.l.b16 %v2073
      %v2209 = vunpack.c.l.b16 %v2074
      %v2210 = vunpack.c.l.b16 %v2075
      %v2211 = vunpack.c.l.b16 %v2076
      %v2212 = vunpack.c.l.b16 %v2077
      %v2213 = vpack.c.b16 %v2150, %v2149
      %v2214 = vpack.c.b16 %v2152, %v2151
      %v2215 = vpack.c.b16 %v2154, %v2153
      %v2216 = vpack.c.b16 %v2156, %v2155
      %v2217 = vpack.c.b16 %v2158, %v2157
      %v2218 = vpack.c.b16 %v2160, %v2159
      %v2219 = vpack.c.b16 %v2162, %v2161
      %v2220 = vpack.c.b16 %v2164, %v2163
      %v2221 = vpack.c.b16 %v2166, %v2165
      %v2222 = vpack.c.b16 %v2168, %v2167
      %v2223 = vpack.c.b16 %v2170, %v2169
      %v2224 = vpack.c.b16 %v2172, %v2171
      %v2225 = vpack.c.b16 %v2174, %v2173
      %v2226 = vpack.c.b16 %v2176, %v2175
      %v2227 = vpack.c.b16 %v2178, %v2177
      %v2228 = vpack.c.b16 %v2180, %v2179
      %v2229 = vpack.c.b16 %v2182, %v2181
      %v2230 = vpack.c.b16 %v2184, %v2183
      %v2231 = vpack.c.b16 %v2186, %v2185
      %v2232 = vpack.c.b16 %v2188, %v2187
      %v2233 = vpack.c.b16 %v2190, %v2189
      %v2234 = vpack.c.b16 %v2192, %v2191
      %v2235 = vpack.c.b16 %v2194, %v2193
      %v2236 = vpack.c.b16 %v2196, %v2195
      %v2237 = vpack.c.b16 %v2198, %v2197
      %v2238 = vpack.c.b16 %v2200, %v2199
      %v2239 = vpack.c.b16 %v2202, %v2201
      %v2240 = vpack.c.b16 %v2204, %v2203
      %v2241 = vpack.c.b16 %v2206, %v2205
      %v2242 = vpack.c.b16 %v2208, %v2207
      %v2243 = vpack.c.b16 %v2210, %v2209
      %v2244 = vpack.c.b16 %v2212, %v2211
      %2277 = vmatprep.subr.bf16.mxu0 0
      %2278 = vmatpush1.bf16.msra.mxu0 %v2220
      %2279 = vmatprep.subr.bf16.mxu0 0
      %2280 = vmatpush1.bf16.msra.mxu0 %v2219
      %2281 = vmatprep.subr.bf16.mxu0 0
      %2282 = vmatpush1.bf16.msra.mxu0 %v2218
      %2283 = vmatprep.subr.bf16.mxu0 0
      %2284 = vmatpush1.bf16.msra.mxu0 %v2217
      %2285 = vmatprep.subr.bf16.mxu0 0
      %2286 = vmatpush1.bf16.msra.mxu0 %v2216
      %2287 = vmatprep.subr.bf16.mxu0 0
      %2288 = vmatpush1.bf16.msra.mxu0 %v2215
      %2289 = vmatprep.subr.bf16.mxu0 0
      %2290 = vmatpush1.bf16.msra.mxu0 %v2214
      %2291 = vmatprep.subr.bf16.mxu0 0
      %2292 = vmatpush1.bf16.msra.mxu0 %v2213
      %2293 = vmatprep.subr.bf16.mxu0 0
      %2294 = vmatpush2.bf16.msra.mxu0 %v2228
      %2295 = vmatprep.subr.bf16.mxu0 0
      %2296 = vmatpush2.bf16.msra.mxu0 %v2227
      %2297 = vmatprep.subr.bf16.mxu0 0
      %2298 = vmatpush2.bf16.msra.mxu0 %v2226
      %2299 = vmatprep.subr.bf16.mxu0 0
      %2300 = vmatpush2.bf16.msra.mxu0 %v2225
      %2301 = vmatprep.subr.bf16.mxu0 0
      %2302 = vmatpush2.bf16.msra.mxu0 %v2224
      %2303 = vmatprep.subr.bf16.mxu0 0
      %2304 = vmatpush2.bf16.msra.mxu0 %v2223
      %2305 = vmatprep.subr.bf16.mxu0 0
      %2306 = vmatpush2.bf16.msra.mxu0 %v2222
      %2307 = vmatprep.subr.bf16.mxu0 0
      %2308 = vmatpush2.bf16.msra.mxu0 %v2221
      %2309 = vmatprep.mubr.bf16.mxu0 %v2011
      %2310 = vmatmul.mubr.bf16.gmra.mxu0 %v2010
      %v2311 = vpop.f32.mrf.mxu0
      %v2312 = vadd.f32 %v2083, %v2311
      %v2313 = vpop.f32.mrf.mxu0
      %v2314 = vpop.f32.mrf.mxu0
      %v2315 = vpop.f32.mrf.mxu0
      %2316 = vdwg.mxu0
      %2317 = vmatprep.subr.bf16.mxu0 0
      %2318 = vmatpush1.bf16.msra.mxu0 %v2236
      %2319 = vmatprep.subr.bf16.mxu0 0
      %2320 = vmatpush1.bf16.msra.mxu0 %v2235
      %2321 = vmatprep.subr.bf16.mxu0 0
      %2322 = vmatpush1.bf16.msra.mxu0 %v2234
      %2323 = vmatprep.subr.bf16.mxu0 0
      %2324 = vmatpush1.bf16.msra.mxu0 %v2233
      %2325 = vmatprep.subr.bf16.mxu0 0
      %2326 = vmatpush1.bf16.msra.mxu0 %v2232
      %2327 = vmatprep.subr.bf16.mxu0 0
      %2328 = vmatpush1.bf16.msra.mxu0 %v2231
      %2329 = vmatprep.subr.bf16.mxu0 0
      %2330 = vmatpush1.bf16.msra.mxu0 %v2230
      %2331 = vmatprep.subr.bf16.mxu0 0
      %2332 = vmatpush1.bf16.msra.mxu0 %v2229
      %2333 = vmatprep.subr.bf16.mxu0 0
      %2334 = vmatpush2.bf16.msra.mxu0 %v2244
      %2335 = vmatprep.subr.bf16.mxu0 0
      %2336 = vmatpush2.bf16.msra.mxu0 %v2243
      %2337 = vmatprep.subr.bf16.mxu0 0
      %2338 = vmatpush2.bf16.msra.mxu0 %v2242
      %2339 = vmatprep.subr.bf16.mxu0 0
      %2340 = vmatpush2.bf16.msra.mxu0 %v2241
      %2341 = vmatprep.subr.bf16.mxu0 0
      %2342 = vmatpush2.bf16.msra.mxu0 %v2240
      %2343 = vmatprep.subr.bf16.mxu0 0
      %2344 = vmatpush2.bf16.msra.mxu0 %v2239
      %2345 = vmatprep.subr.bf16.mxu0 0
      %2346 = vmatpush2.bf16.msra.mxu0 %v2238
      %2347 = vmatprep.subr.bf16.mxu0 0
      %2348 = vmatpush2.bf16.msra.mxu0 %v2237
      %2349 = vmatprep.mubr.bf16.mxu0 %v2013
      %2350 = vmatmul.mubr.bf16.gmra.mxu0 %v2012
      %v2351 = vpop.f32.mrf.mxu0
      %v2352 = vadd.f32 %v2312, %v2351
      %v2353 = vpop.f32.mrf.mxu0
      %v2354 = vpop.f32.mrf.mxu0
      %v2355 = vpop.f32.mrf.mxu0
      %2356 = vdwg.mxu0
      %2357 = vst [vmem:[#allocation11] sm:$0xff] %v2352
    $region45: #{tpu_custom_call.1} parent=1 // pred_fallthru
      _
    // Predicated region
    $region46: #{tpu_custom_call.1} parent=1 // pred_check
      _
    $region47: #{tpu_custom_call.1} parent=1 // pred_check_branch
      %2359 = sbr.rel (0) target = $region49
    $region48: #{tpu_custom_call.1} parent=1 // pred_region
      %s2361 = ssub.s32 128, 128
      %2362 = vsyncadd [#allocation5], %s2361
      %s2364 = sshll.u32 [#allocation11], 4
      %s2365 = int_to_ptr.vmem [resolvable:$true] %s2364
      %2367 = dma.vmem_to_hbm [thread:$0]  %s2365, 128, %s5, [#allocation5]
    $region49: #{tpu_custom_call.1} parent=1 // pred_fallthru
      _
    // Predicated region
    $region50: #{tpu_custom_call.1} parent=1 // pred_check
      _
    $region51: #{tpu_custom_call.1} parent=1 // pred_check_branch
      %2369 = sbr.rel (0) target = $region53
    $region52: #{tpu_custom_call.1} parent=1 // pred_region
      %2370 = dma.done [#allocation5], 128
    $region53: #{tpu_custom_call.1} parent=1 // pred_fallthru
      _
    %2371 = vsyncpa [#allocation4], 1
    %2372 = vsyncpa [#allocation7], 1
    %2373 = vsyncpa [#allocation10], 1
    %2374 = vsyncpa [#allocation5], 1

</llo_original>
